<compile_context>
chip_gen: v6e
topology: v6e:2x2x1
jax: 0.10.0
libtpu: 0.0.40
codegen_flags: <defaults>
</compile_context>

<pallas_src>
import numpy as np

import jax
import jax.numpy as jnp
from jax import lax
from jax.experimental import pallas as pl
from jax.experimental.pallas import tpu as pltpu  # noqa: F401  (TPU backend)

_NEG_SLOPE = 0.2
_STRIDE = 2
_PAD = 1


def _leaky(y):
    return jnp.where(y >= 0.0, y, _NEG_SLOPE * y)


# ----------------------------------------------------------------------------
# The single fused Pallas kernel:
#   3x (conv + LeakyReLU) + flatten + fc1 + LeakyReLU + fc2
# All operands are whole-array VMEM blocks; the body is a short static chain
# of 2-D MXU dots and VPU elementwise ops.
# ----------------------------------------------------------------------------
def _net1_kernel(x_ref,
                 s1_ref, m1_ref, b1_ref,
                 s2_ref, m2_ref, b2_ref,
                 s3_ref, m3_ref, b3_ref,
                 t_ref, wf1_ref, bf1_ref, wf2_ref, bf2_ref,
                 o_ref):
    def conv_stage(a, s_ref, m_ref, b_ref):
        # a: (N*H_in, W_in*C_in) -> (N*H_out, W_out*C_out)
        y = None
        for i in range(s_ref.shape[0]):                          # kh = 4, static unroll
            rows = jnp.dot(s_ref[i], a, preferred_element_type=jnp.float32)
            part = jnp.dot(rows, m_ref[i], preferred_element_type=jnp.float32)
            y = part if y is None else y + part
        return _leaky(y + b_ref[...])

    a = x_ref[...]                                               # (N*16, 16*4) = (32, 64)
    a = conv_stage(a, s1_ref, m1_ref, b1_ref)                    # (16, 64)
    a = conv_stage(a, s2_ref, m2_ref, b2_ref)                    # (8, 64)
    a = conv_stage(a, s3_ref, m3_ref, b3_ref)                    # (4, 64)

    # Flatten (PyTorch channel-major order folded into wf1) + fc1 + LeakyReLU.
    y1 = None
    for h in range(t_ref.shape[0]):                              # H3 = 2, static unroll
        rows = jnp.dot(t_ref[h], a, preferred_element_type=jnp.float32)
        part = jnp.dot(rows, wf1_ref[h], preferred_element_type=jnp.float32)
        y1 = part if y1 is None else y1 + part
    y1 = _leaky(y1 + bf1_ref[...])

    # fc2 (no activation).
    out = jnp.dot(y1, wf2_ref[...], preferred_element_type=jnp.float32)
    o_ref[...] = (out + bf2_ref[...]).astype(o_ref.dtype)


# ----------------------------------------------------------------------------
# One-time parameter preparation (host side): fold conv weights, spatial zero
# padding, stride, the channel-major Flatten permutation and the fc layouts
# into dense matmul operands for the fused kernel.
# ----------------------------------------------------------------------------
def _build_S(kh, stride, pad, batch, h_in, h_out):
    s = np.zeros((kh, batch * h_out, batch * h_in), np.float32)
    for i in range(kh):
        for n in range(batch):
            for oh in range(h_out):
                h = stride * oh + i - pad
                if 0 <= h < h_in:
                    s[i, n * h_out + oh, n * h_in + h] = 1.0
    return s


def _build_M(weight, w_in, w_out, stride, pad):
    cout, cin, kh, kw = weight.shape
    m = np.zeros((kh, w_in * cin, w_out * cout), np.float32)
    for i in range(kh):
        for ow in range(w_out):
            for j in range(kw):
                wi = stride * ow + j - pad
                if 0 <= wi < w_in:
                    m[i, wi * cin:(wi + 1) * cin, ow * cout:(ow + 1) * cout] = \
                        weight[:, :, i, j].T
    return m


def pack_params(params, *, batch, in_hw, stride=_STRIDE, pad=_PAD):
    p = {k: np.asarray(v, np.float32) for k, v in params.items()}
    packed = []
    h_in = w_in = in_hw
    for idx in (1, 2, 3):
        wt, bs = p[f"conv{idx}_w"], p[f"conv{idx}_b"]
        kh = wt.shape[2]
        h_out = (h_in + 2 * pad - kh) // stride + 1
        w_out = (w_in + 2 * pad - kh) // stride + 1
        packed.append(jnp.asarray(_build_S(kh, stride, pad, batch, h_in, h_out)))
        packed.append(jnp.asarray(_build_M(wt, w_in, w_out, stride, pad)))
        packed.append(jnp.asarray(np.tile(bs, w_out)[None, :]))
        h_in, w_in = h_out, w_out

    h3, w3 = h_in, w_in
    c3 = p["conv3_w"].shape[0]
    f1 = p["fc1_w"].shape[0]

    # Flatten selectors: pick rows (n, h) of the conv3 activation per h.
    t = np.zeros((h3, batch, batch * h3), np.float32)
    for h in range(h3):
        for n in range(batch):
            t[h, n, n * h3 + h] = 1.0
    packed.append(jnp.asarray(t))

    # fc1 weight: permute from PyTorch channel-major flatten (c, h, w) to the
    # kernel's (h)-rows x (w, c)-lanes layout, split by h.
    wf1 = p["fc1_w"].reshape(f1, c3, h3, w3).transpose(2, 3, 1, 0) \
                    .reshape(h3, w3 * c3, f1)
    packed.append(jnp.asarray(wf1))
    packed.append(jnp.asarray(p["fc1_b"][None, :]))
    packed.append(jnp.asarray(p["fc2_w"].T))
    packed.append(jnp.asarray(p["fc2_b"][None, :]))
    return tuple(packed)


# ----------------------------------------------------------------------------
# Forward pass: one tiny boundary layout op + ONE pallas_call.
# ----------------------------------------------------------------------------
def net1_forward(x, packed):
    n, c, h, w = x.shape
    # Only remaining host-side layout op: NCHW -> rows=(n,h), lanes=(w,c).
    x2d = jnp.transpose(x, (0, 2, 3, 1)).reshape(n * h, w * c).astype(jnp.float32)

    operands = (x2d,) + tuple(packed)
    out_features = packed[-1].shape[-1]

    def full_spec(a):
        nd = a.ndim
        return pl.BlockSpec(a.shape, lambda nd=nd: (0,) * nd)

    # Advisory cost hint for the XLA scheduler.
    flops = 0
    for i in range(3):
        s, m = operands[1 + 3 * i], operands[2 + 3 * i]
        kh, r_out, r_in = s.shape
        flops += 2 * kh * r_out * (r_in * m.shape[1] + m.shape[1] * m.shape[2])
    t, wf1, wf2 = operands[10], operands[11], operands[13]
    flops += 2 * t.shape[0] * t.shape[1] * (t.shape[2] * wf1.shape[1]
                                            + wf1.shape[1] * wf1.shape[2])
    flops += 2 * t.shape[1] * wf2.shape[0] * wf2.shape[1]
    bytes_accessed = sum(int(a.size) * 4 for a in operands) + n * out_features * 4

    return pl.pallas_call(
        _net1_kernel,
        out_shape=jax.ShapeDtypeStruct((n, out_features), jnp.float32),
        in_specs=[full_spec(a) for a in operands],
        out_specs=pl.BlockSpec((n, out_features), lambda: (0, 0)),
        cost_estimate=pl.CostEstimate(flops=int(flops), transcendentals=0,
                                      bytes_accessed=int(bytes_accessed)),
    )(*operands)


# ----------------------------------------------------------------------------
# Plain-JAX reference (mirrors the PyTorch module) + parameter init.
# ----------------------------------------------------------------------------
def _reference_forward(x, params):
    def conv(a, wt, bs):
        y = lax.conv_general_dilated(a, wt, window_strides=(2, 2),
                                     padding=((1, 1), (1, 1)),
                                     dimension_numbers=("NCHW", "OIHW", "NCHW"),
                                     precision=lax.Precision.HIGHEST)
        y = y + bs[None, :, None, None]
        return jnp.where(y >= 0, y, _NEG_SLOPE * y)

    h = conv(x, params["conv1_w"], params["conv1_b"])
    h = conv(h, params["conv2_w"], params["conv2_b"])
    h = conv(h, params["conv3_w"], params["conv3_b"])
    h = h.reshape(h.shape[0], -1)
    h = jnp.dot(h, params["fc1_w"].T, precision=lax.Precision.HIGHEST) + params["fc1_b"]
    h = jnp.where(h >= 0, h, _NEG_SLOPE * h)
    return jnp.dot(h, params["fc2_w"].T, precision=lax.Precision.HIGHEST) + params["fc2_b"]


def init_params(key, n_channels, capacity, k, spatial_final, x_fdim1, x_fdim2):
    keys = jax.random.split(key, 10)

    def w(k_, shape, fan_in):
        scale = 1.0 / jnp.sqrt(jnp.float32(fan_in))
        return jax.random.uniform(k_, shape, jnp.float32, -scale, scale)

    c1, c2, c3 = capacity, capacity * 2, capacity * 4
    fc_in = c3 * spatial_final ** 2
    return {
        "conv1_w": w(keys[0], (c1, n_channels, k, k), n_channels * k * k),
        "conv1_b": w(keys[1], (c1,), n_channels * k * k),
        "conv2_w": w(keys[2], (c2, c1, k, k), c1 * k * k),
        "conv2_b": w(keys[3], (c2,), c1 * k * k),
        "conv3_w": w(keys[4], (c3, c2, k, k), c2 * k * k),
        "conv3_b": w(keys[5], (c3,), c2 * k * k),
        "fc1_w": w(keys[6], (x_fdim1, fc_in), fc_in),
        "fc1_b": w(keys[7], (x_fdim1,), fc_in),
        "fc2_w": w(keys[8], (x_fdim2, x_fdim1), x_fdim1),
        "fc2_b": w(keys[9], (x_fdim2,), x_fdim1),
    }


if __name__ == "__main__":
    N_CHANNELS, CAPACITY, KSIZE = 4, 8, 4
    SPATIAL, SPATIAL_FINAL, X_FDIM1, X_FDIM2 = 16, 2, 32, 16
    BATCH = 2

    key = jax.random.PRNGKey(0)
    k_x, k_p = jax.random.split(key)
    x = jax.random.normal(k_x, (BATCH, N_CHANNELS, SPATIAL, SPATIAL), jnp.float32)
    params = init_params(k_p, N_CHANNELS, CAPACITY, KSIZE,
                         SPATIAL_FINAL, X_FDIM1, X_FDIM2)

    packed = pack_params(params, batch=BATCH, in_hw=SPATIAL)  # one-time prep

    out = jax.jit(net1_forward)(x, packed)
    out = jax.block_until_ready(out)
    assert out.shape == (BATCH, X_FDIM2), out.shape
    assert bool(jnp.all(jnp.isfinite(out)))

    # Numerical cross-check against a plain-JAX rendition of the PyTorch module.
    ref = _reference_forward(x, params)
    assert bool(jnp.allclose(out, ref, atol=1e-3, rtol=1e-3)), (
        float(jnp.max(jnp.abs(out - ref))))

    print("KERNEL_OK")
</pallas_src>

<mosaic_0001>
module attributes {stable_mosaic.version = 11 : i64} {
  func.func @_net1_kernel(%arg0: memref<32x64xf32, #tpu.memory_space<vmem>>, %arg1: memref<4x16x32xf32, #tpu.memory_space<vmem>>, %arg2: memref<4x64x64xf32, #tpu.memory_space<vmem>>, %arg3: memref<1x64xf32, #tpu.memory_space<vmem>>, %arg4: memref<4x8x16xf32, #tpu.memory_space<vmem>>, %arg5: memref<4x64x64xf32, #tpu.memory_space<vmem>>, %arg6: memref<1x64xf32, #tpu.memory_space<vmem>>, %arg7: memref<4x4x8xf32, #tpu.memory_space<vmem>>, %arg8: memref<4x64x64xf32, #tpu.memory_space<vmem>>, %arg9: memref<1x64xf32, #tpu.memory_space<vmem>>, %arg10: memref<2x2x4xf32, #tpu.memory_space<vmem>>, %arg11: memref<2x64x32xf32, #tpu.memory_space<vmem>>, %arg12: memref<1x32xf32, #tpu.memory_space<vmem>>, %arg13: memref<32x16xf32, #tpu.memory_space<vmem>>, %arg14: memref<1x16xf32, #tpu.memory_space<vmem>>, %arg15: memref<2x16xf32, #tpu.memory_space<vmem>>) attributes {dimension_semantics = [], scalar_prefetch = 0 : i64, scratch_operands = 0 : i64, tpu.core_type = #tpu.core_type<tc>} {
    %c0 = arith.constant 0 : index
    %c0_0 = arith.constant 0 : index
    %0 = vector.load %arg0[%c0, %c0_0] : memref<32x64xf32, #tpu.memory_space<vmem>>, vector<32x64xf32>
    %c0_1 = arith.constant 0 : index
    %c0_2 = arith.constant 0 : index
    %c0_3 = arith.constant 0 : index
    %1 = vector.load %arg1[%c0_1, %c0_2, %c0_3] : memref<4x16x32xf32, #tpu.memory_space<vmem>>, vector<1x16x32xf32>
    %2 = vector.shape_cast %1 : vector<1x16x32xf32> to vector<16x32xf32>
    %cst = arith.constant dense<0.000000e+00> : vector<16x64xf32>
    %3 = tpu.matmul %2, %0, %cst {dimension_numbers = #tpu.dot_dimension_numbers<[1], [0], [0], [1], [0, 0, 1, 1], [], []>} : vector<16x32xf32>, vector<32x64xf32>, vector<16x64xf32> -> vector<16x64xf32>
    %c0_4 = arith.constant 0 : index
    %c0_5 = arith.constant 0 : index
    %c0_6 = arith.constant 0 : index
    %4 = vector.load %arg2[%c0_4, %c0_5, %c0_6] : memref<4x64x64xf32, #tpu.memory_space<vmem>>, vector<1x64x64xf32>
    %5 = vector.shape_cast %4 : vector<1x64x64xf32> to vector<64x64xf32>
    %cst_7 = arith.constant dense<0.000000e+00> : vector<16x64xf32>
    %6 = tpu.matmul %3, %5, %cst_7 {dimension_numbers = #tpu.dot_dimension_numbers<[1], [0], [0], [1], [0, 0, 1, 1], [], []>} : vector<16x64xf32>, vector<64x64xf32>, vector<16x64xf32> -> vector<16x64xf32>
    %c1 = arith.constant 1 : index
    %c0_8 = arith.constant 0 : index
    %c0_9 = arith.constant 0 : index
    %7 = vector.load %arg1[%c1, %c0_8, %c0_9] : memref<4x16x32xf32, #tpu.memory_space<vmem>>, vector<1x16x32xf32>
    %8 = vector.shape_cast %7 : vector<1x16x32xf32> to vector<16x32xf32>
    %cst_10 = arith.constant dense<0.000000e+00> : vector<16x64xf32>
    %9 = tpu.matmul %8, %0, %cst_10 {dimension_numbers = #tpu.dot_dimension_numbers<[1], [0], [0], [1], [0, 0, 1, 1], [], []>} : vector<16x32xf32>, vector<32x64xf32>, vector<16x64xf32> -> vector<16x64xf32>
    %c1_11 = arith.constant 1 : index
    %c0_12 = arith.constant 0 : index
    %c0_13 = arith.constant 0 : index
    %10 = vector.load %arg2[%c1_11, %c0_12, %c0_13] : memref<4x64x64xf32, #tpu.memory_space<vmem>>, vector<1x64x64xf32>
    %11 = vector.shape_cast %10 : vector<1x64x64xf32> to vector<64x64xf32>
    %cst_14 = arith.constant dense<0.000000e+00> : vector<16x64xf32>
    %12 = tpu.matmul %9, %11, %cst_14 {dimension_numbers = #tpu.dot_dimension_numbers<[1], [0], [0], [1], [0, 0, 1, 1], [], []>} : vector<16x64xf32>, vector<64x64xf32>, vector<16x64xf32> -> vector<16x64xf32>
    %13 = arith.addf %6, %12 : vector<16x64xf32>
    %c2 = arith.constant 2 : index
    %c0_15 = arith.constant 0 : index
    %c0_16 = arith.constant 0 : index
    %14 = vector.load %arg1[%c2, %c0_15, %c0_16] : memref<4x16x32xf32, #tpu.memory_space<vmem>>, vector<1x16x32xf32>
    %15 = vector.shape_cast %14 : vector<1x16x32xf32> to vector<16x32xf32>
    %cst_17 = arith.constant dense<0.000000e+00> : vector<16x64xf32>
    %16 = tpu.matmul %15, %0, %cst_17 {dimension_numbers = #tpu.dot_dimension_numbers<[1], [0], [0], [1], [0, 0, 1, 1], [], []>} : vector<16x32xf32>, vector<32x64xf32>, vector<16x64xf32> -> vector<16x64xf32>
    %c2_18 = arith.constant 2 : index
    %c0_19 = arith.constant 0 : index
    %c0_20 = arith.constant 0 : index
    %17 = vector.load %arg2[%c2_18, %c0_19, %c0_20] : memref<4x64x64xf32, #tpu.memory_space<vmem>>, vector<1x64x64xf32>
    %18 = vector.shape_cast %17 : vector<1x64x64xf32> to vector<64x64xf32>
    %cst_21 = arith.constant dense<0.000000e+00> : vector<16x64xf32>
    %19 = tpu.matmul %16, %18, %cst_21 {dimension_numbers = #tpu.dot_dimension_numbers<[1], [0], [0], [1], [0, 0, 1, 1], [], []>} : vector<16x64xf32>, vector<64x64xf32>, vector<16x64xf32> -> vector<16x64xf32>
    %20 = arith.addf %13, %19 : vector<16x64xf32>
    %c3 = arith.constant 3 : index
    %c0_22 = arith.constant 0 : index
    %c0_23 = arith.constant 0 : index
    %21 = vector.load %arg1[%c3, %c0_22, %c0_23] : memref<4x16x32xf32, #tpu.memory_space<vmem>>, vector<1x16x32xf32>
    %22 = vector.shape_cast %21 : vector<1x16x32xf32> to vector<16x32xf32>
    %cst_24 = arith.constant dense<0.000000e+00> : vector<16x64xf32>
    %23 = tpu.matmul %22, %0, %cst_24 {dimension_numbers = #tpu.dot_dimension_numbers<[1], [0], [0], [1], [0, 0, 1, 1], [], []>} : vector<16x32xf32>, vector<32x64xf32>, vector<16x64xf32> -> vector<16x64xf32>
    %c3_25 = arith.constant 3 : index
    %c0_26 = arith.constant 0 : index
    %c0_27 = arith.constant 0 : index
    %24 = vector.load %arg2[%c3_25, %c0_26, %c0_27] : memref<4x64x64xf32, #tpu.memory_space<vmem>>, vector<1x64x64xf32>
    %25 = vector.shape_cast %24 : vector<1x64x64xf32> to vector<64x64xf32>
    %cst_28 = arith.constant dense<0.000000e+00> : vector<16x64xf32>
    %26 = tpu.matmul %23, %25, %cst_28 {dimension_numbers = #tpu.dot_dimension_numbers<[1], [0], [0], [1], [0, 0, 1, 1], [], []>} : vector<16x64xf32>, vector<64x64xf32>, vector<16x64xf32> -> vector<16x64xf32>
    %27 = arith.addf %20, %26 : vector<16x64xf32>
    %c0_29 = arith.constant 0 : index
    %c0_30 = arith.constant 0 : index
    %28 = vector.load %arg3[%c0_29, %c0_30] : memref<1x64xf32, #tpu.memory_space<vmem>>, vector<1x64xf32>
    %29 = vector.broadcast %28 : vector<1x64xf32> to vector<16x64xf32>
    %30 = arith.addf %27, %29 : vector<16x64xf32>
    %cst_31 = arith.constant 0.000000e+00 : f32
    %31 = vector.broadcast %cst_31 : f32 to vector<16x64xf32>
    %32 = arith.cmpf oge, %30, %31 : vector<16x64xf32>
    %cst_32 = arith.constant 2.000000e-01 : f32
    %33 = vector.broadcast %cst_32 : f32 to vector<16x64xf32>
    %34 = arith.mulf %33, %30 : vector<16x64xf32>
    %35 = arith.select %32, %30, %34 : vector<16x64xi1>, vector<16x64xf32>
    %c0_33 = arith.constant 0 : index
    %c0_34 = arith.constant 0 : index
    %c0_35 = arith.constant 0 : index
    %36 = vector.load %arg4[%c0_33, %c0_34, %c0_35] : memref<4x8x16xf32, #tpu.memory_space<vmem>>, vector<1x8x16xf32>
    %37 = vector.shape_cast %36 : vector<1x8x16xf32> to vector<8x16xf32>
    %cst_36 = arith.constant dense<0.000000e+00> : vector<8x64xf32>
    %38 = tpu.matmul %37, %35, %cst_36 {dimension_numbers = #tpu.dot_dimension_numbers<[1], [0], [0], [1], [0, 0, 1, 1], [], []>} : vector<8x16xf32>, vector<16x64xf32>, vector<8x64xf32> -> vector<8x64xf32>
    %c0_37 = arith.constant 0 : index
    %c0_38 = arith.constant 0 : index
    %c0_39 = arith.constant 0 : index
    %39 = vector.load %arg5[%c0_37, %c0_38, %c0_39] : memref<4x64x64xf32, #tpu.memory_space<vmem>>, vector<1x64x64xf32>
    %40 = vector.shape_cast %39 : vector<1x64x64xf32> to vector<64x64xf32>
    %cst_40 = arith.constant dense<0.000000e+00> : vector<8x64xf32>
    %41 = tpu.matmul %38, %40, %cst_40 {dimension_numbers = #tpu.dot_dimension_numbers<[1], [0], [0], [1], [0, 0, 1, 1], [], []>} : vector<8x64xf32>, vector<64x64xf32>, vector<8x64xf32> -> vector<8x64xf32>
    %c1_41 = arith.constant 1 : index
    %c0_42 = arith.constant 0 : index
    %c0_43 = arith.constant 0 : index
    %42 = vector.load %arg4[%c1_41, %c0_42, %c0_43] : memref<4x8x16xf32, #tpu.memory_space<vmem>>, vector<1x8x16xf32>
    %43 = vector.shape_cast %42 : vector<1x8x16xf32> to vector<8x16xf32>
    %cst_44 = arith.constant dense<0.000000e+00> : vector<8x64xf32>
    %44 = tpu.matmul %43, %35, %cst_44 {dimension_numbers = #tpu.dot_dimension_numbers<[1], [0], [0], [1], [0, 0, 1, 1], [], []>} : vector<8x16xf32>, vector<16x64xf32>, vector<8x64xf32> -> vector<8x64xf32>
    %c1_45 = arith.constant 1 : index
    %c0_46 = arith.constant 0 : index
    %c0_47 = arith.constant 0 : index
    %45 = vector.load %arg5[%c1_45, %c0_46, %c0_47] : memref<4x64x64xf32, #tpu.memory_space<vmem>>, vector<1x64x64xf32>
    %46 = vector.shape_cast %45 : vector<1x64x64xf32> to vector<64x64xf32>
    %cst_48 = arith.constant dense<0.000000e+00> : vector<8x64xf32>
    %47 = tpu.matmul %44, %46, %cst_48 {dimension_numbers = #tpu.dot_dimension_numbers<[1], [0], [0], [1], [0, 0, 1, 1], [], []>} : vector<8x64xf32>, vector<64x64xf32>, vector<8x64xf32> -> vector<8x64xf32>
    %48 = arith.addf %41, %47 : vector<8x64xf32>
    %c2_49 = arith.constant 2 : index
    %c0_50 = arith.constant 0 : index
    %c0_51 = arith.constant 0 : index
    %49 = vector.load %arg4[%c2_49, %c0_50, %c0_51] : memref<4x8x16xf32, #tpu.memory_space<vmem>>, vector<1x8x16xf32>
    %50 = vector.shape_cast %49 : vector<1x8x16xf32> to vector<8x16xf32>
    %cst_52 = arith.constant dense<0.000000e+00> : vector<8x64xf32>
    %51 = tpu.matmul %50, %35, %cst_52 {dimension_numbers = #tpu.dot_dimension_numbers<[1], [0], [0], [1], [0, 0, 1, 1], [], []>} : vector<8x16xf32>, vector<16x64xf32>, vector<8x64xf32> -> vector<8x64xf32>
    %c2_53 = arith.constant 2 : index
    %c0_54 = arith.constant 0 : index
    %c0_55 = arith.constant 0 : index
    %52 = vector.load %arg5[%c2_53, %c0_54, %c0_55] : memref<4x64x64xf32, #tpu.memory_space<vmem>>, vector<1x64x64xf32>
    %53 = vector.shape_cast %52 : vector<1x64x64xf32> to vector<64x64xf32>
    %cst_56 = arith.constant dense<0.000000e+00> : vector<8x64xf32>
    %54 = tpu.matmul %51, %53, %cst_56 {dimension_numbers = #tpu.dot_dimension_numbers<[1], [0], [0], [1], [0, 0, 1, 1], [], []>} : vector<8x64xf32>, vector<64x64xf32>, vector<8x64xf32> -> vector<8x64xf32>
    %55 = arith.addf %48, %54 : vector<8x64xf32>
    %c3_57 = arith.constant 3 : index
    %c0_58 = arith.constant 0 : index
    %c0_59 = arith.constant 0 : index
    %56 = vector.load %arg4[%c3_57, %c0_58, %c0_59] : memref<4x8x16xf32, #tpu.memory_space<vmem>>, vector<1x8x16xf32>
    %57 = vector.shape_cast %56 : vector<1x8x16xf32> to vector<8x16xf32>
    %cst_60 = arith.constant dense<0.000000e+00> : vector<8x64xf32>
    %58 = tpu.matmul %57, %35, %cst_60 {dimension_numbers = #tpu.dot_dimension_numbers<[1], [0], [0], [1], [0, 0, 1, 1], [], []>} : vector<8x16xf32>, vector<16x64xf32>, vector<8x64xf32> -> vector<8x64xf32>
    %c3_61 = arith.constant 3 : index
    %c0_62 = arith.constant 0 : index
    %c0_63 = arith.constant 0 : index
    %59 = vector.load %arg5[%c3_61, %c0_62, %c0_63] : memref<4x64x64xf32, #tpu.memory_space<vmem>>, vector<1x64x64xf32>
    %60 = vector.shape_cast %59 : vector<1x64x64xf32> to vector<64x64xf32>
    %cst_64 = arith.constant dense<0.000000e+00> : vector<8x64xf32>
    %61 = tpu.matmul %58, %60, %cst_64 {dimension_numbers = #tpu.dot_dimension_numbers<[1], [0], [0], [1], [0, 0, 1, 1], [], []>} : vector<8x64xf32>, vector<64x64xf32>, vector<8x64xf32> -> vector<8x64xf32>
    %62 = arith.addf %55, %61 : vector<8x64xf32>
    %c0_65 = arith.constant 0 : index
    %c0_66 = arith.constant 0 : index
    %63 = vector.load %arg6[%c0_65, %c0_66] : memref<1x64xf32, #tpu.memory_space<vmem>>, vector<1x64xf32>
    %64 = vector.broadcast %63 : vector<1x64xf32> to vector<8x64xf32>
    %65 = arith.addf %62, %64 : vector<8x64xf32>
    %cst_67 = arith.constant 0.000000e+00 : f32
    %66 = vector.broadcast %cst_67 : f32 to vector<8x64xf32>
    %67 = arith.cmpf oge, %65, %66 : vector<8x64xf32>
    %cst_68 = arith.constant 2.000000e-01 : f32
    %68 = vector.broadcast %cst_68 : f32 to vector<8x64xf32>
    %69 = arith.mulf %68, %65 : vector<8x64xf32>
    %70 = arith.select %67, %65, %69 : vector<8x64xi1>, vector<8x64xf32>
    %c0_69 = arith.constant 0 : index
    %c0_70 = arith.constant 0 : index
    %c0_71 = arith.constant 0 : index
    %71 = vector.load %arg7[%c0_69, %c0_70, %c0_71] : memref<4x4x8xf32, #tpu.memory_space<vmem>>, vector<1x4x8xf32>
    %72 = vector.shape_cast %71 : vector<1x4x8xf32> to vector<4x8xf32>
    %cst_72 = arith.constant dense<0.000000e+00> : vector<4x64xf32>
    %73 = tpu.matmul %72, %70, %cst_72 {dimension_numbers = #tpu.dot_dimension_numbers<[1], [0], [0], [1], [0, 0, 1, 1], [], []>} : vector<4x8xf32>, vector<8x64xf32>, vector<4x64xf32> -> vector<4x64xf32>
    %c0_73 = arith.constant 0 : index
    %c0_74 = arith.constant 0 : index
    %c0_75 = arith.constant 0 : index
    %74 = vector.load %arg8[%c0_73, %c0_74, %c0_75] : memref<4x64x64xf32, #tpu.memory_space<vmem>>, vector<1x64x64xf32>
    %75 = vector.shape_cast %74 : vector<1x64x64xf32> to vector<64x64xf32>
    %cst_76 = arith.constant dense<0.000000e+00> : vector<4x64xf32>
    %76 = tpu.matmul %73, %75, %cst_76 {dimension_numbers = #tpu.dot_dimension_numbers<[1], [0], [0], [1], [0, 0, 1, 1], [], []>} : vector<4x64xf32>, vector<64x64xf32>, vector<4x64xf32> -> vector<4x64xf32>
    %c1_77 = arith.constant 1 : index
    %c0_78 = arith.constant 0 : index
    %c0_79 = arith.constant 0 : index
    %77 = vector.load %arg7[%c1_77, %c0_78, %c0_79] : memref<4x4x8xf32, #tpu.memory_space<vmem>>, vector<1x4x8xf32>
    %78 = vector.shape_cast %77 : vector<1x4x8xf32> to vector<4x8xf32>
    %cst_80 = arith.constant dense<0.000000e+00> : vector<4x64xf32>
    %79 = tpu.matmul %78, %70, %cst_80 {dimension_numbers = #tpu.dot_dimension_numbers<[1], [0], [0], [1], [0, 0, 1, 1], [], []>} : vector<4x8xf32>, vector<8x64xf32>, vector<4x64xf32> -> vector<4x64xf32>
    %c1_81 = arith.constant 1 : index
    %c0_82 = arith.constant 0 : index
    %c0_83 = arith.constant 0 : index
    %80 = vector.load %arg8[%c1_81, %c0_82, %c0_83] : memref<4x64x64xf32, #tpu.memory_space<vmem>>, vector<1x64x64xf32>
    %81 = vector.shape_cast %80 : vector<1x64x64xf32> to vector<64x64xf32>
    %cst_84 = arith.constant dense<0.000000e+00> : vector<4x64xf32>
    %82 = tpu.matmul %79, %81, %cst_84 {dimension_numbers = #tpu.dot_dimension_numbers<[1], [0], [0], [1], [0, 0, 1, 1], [], []>} : vector<4x64xf32>, vector<64x64xf32>, vector<4x64xf32> -> vector<4x64xf32>
    %83 = arith.addf %76, %82 : vector<4x64xf32>
    %c2_85 = arith.constant 2 : index
    %c0_86 = arith.constant 0 : index
    %c0_87 = arith.constant 0 : index
    %84 = vector.load %arg7[%c2_85, %c0_86, %c0_87] : memref<4x4x8xf32, #tpu.memory_space<vmem>>, vector<1x4x8xf32>
    %85 = vector.shape_cast %84 : vector<1x4x8xf32> to vector<4x8xf32>
    %cst_88 = arith.constant dense<0.000000e+00> : vector<4x64xf32>
    %86 = tpu.matmul %85, %70, %cst_88 {dimension_numbers = #tpu.dot_dimension_numbers<[1], [0], [0], [1], [0, 0, 1, 1], [], []>} : vector<4x8xf32>, vector<8x64xf32>, vector<4x64xf32> -> vector<4x64xf32>
    %c2_89 = arith.constant 2 : index
    %c0_90 = arith.constant 0 : index
    %c0_91 = arith.constant 0 : index
    %87 = vector.load %arg8[%c2_89, %c0_90, %c0_91] : memref<4x64x64xf32, #tpu.memory_space<vmem>>, vector<1x64x64xf32>
    %88 = vector.shape_cast %87 : vector<1x64x64xf32> to vector<64x64xf32>
    %cst_92 = arith.constant dense<0.000000e+00> : vector<4x64xf32>
    %89 = tpu.matmul %86, %88, %cst_92 {dimension_numbers = #tpu.dot_dimension_numbers<[1], [0], [0], [1], [0, 0, 1, 1], [], []>} : vector<4x64xf32>, vector<64x64xf32>, vector<4x64xf32> -> vector<4x64xf32>
    %90 = arith.addf %83, %89 : vector<4x64xf32>
    %c3_93 = arith.constant 3 : index
    %c0_94 = arith.constant 0 : index
    %c0_95 = arith.constant 0 : index
    %91 = vector.load %arg7[%c3_93, %c0_94, %c0_95] : memref<4x4x8xf32, #tpu.memory_space<vmem>>, vector<1x4x8xf32>
    %92 = vector.shape_cast %91 : vector<1x4x8xf32> to vector<4x8xf32>
    %cst_96 = arith.constant dense<0.000000e+00> : vector<4x64xf32>
    %93 = tpu.matmul %92, %70, %cst_96 {dimension_numbers = #tpu.dot_dimension_numbers<[1], [0], [0], [1], [0, 0, 1, 1], [], []>} : vector<4x8xf32>, vector<8x64xf32>, vector<4x64xf32> -> vector<4x64xf32>
    %c3_97 = arith.constant 3 : index
    %c0_98 = arith.constant 0 : index
    %c0_99 = arith.constant 0 : index
    %94 = vector.load %arg8[%c3_97, %c0_98, %c0_99] : memref<4x64x64xf32, #tpu.memory_space<vmem>>, vector<1x64x64xf32>
    %95 = vector.shape_cast %94 : vector<1x64x64xf32> to vector<64x64xf32>
    %cst_100 = arith.constant dense<0.000000e+00> : vector<4x64xf32>
    %96 = tpu.matmul %93, %95, %cst_100 {dimension_numbers = #tpu.dot_dimension_numbers<[1], [0], [0], [1], [0, 0, 1, 1], [], []>} : vector<4x64xf32>, vector<64x64xf32>, vector<4x64xf32> -> vector<4x64xf32>
    %97 = arith.addf %90, %96 : vector<4x64xf32>
    %c0_101 = arith.constant 0 : index
    %c0_102 = arith.constant 0 : index
    %98 = vector.load %arg9[%c0_101, %c0_102] : memref<1x64xf32, #tpu.memory_space<vmem>>, vector<1x64xf32>
    %99 = vector.broadcast %98 : vector<1x64xf32> to vector<4x64xf32>
    %100 = arith.addf %97, %99 : vector<4x64xf32>
    %cst_103 = arith.constant 0.000000e+00 : f32
    %101 = vector.broadcast %cst_103 : f32 to vector<4x64xf32>
    %102 = arith.cmpf oge, %100, %101 : vector<4x64xf32>
    %cst_104 = arith.constant 2.000000e-01 : f32
    %103 = vector.broadcast %cst_104 : f32 to vector<4x64xf32>
    %104 = arith.mulf %103, %100 : vector<4x64xf32>
    %105 = arith.select %102, %100, %104 : vector<4x64xi1>, vector<4x64xf32>
    %c0_105 = arith.constant 0 : index
    %c0_106 = arith.constant 0 : index
    %c0_107 = arith.constant 0 : index
    %106 = vector.load %arg10[%c0_105, %c0_106, %c0_107] : memref<2x2x4xf32, #tpu.memory_space<vmem>>, vector<1x2x4xf32>
    %107 = vector.shape_cast %106 : vector<1x2x4xf32> to vector<2x4xf32>
    %cst_108 = arith.constant dense<0.000000e+00> : vector<2x64xf32>
    %108 = tpu.matmul %107, %105, %cst_108 {dimension_numbers = #tpu.dot_dimension_numbers<[1], [0], [0], [1], [0, 0, 1, 1], [], []>} : vector<2x4xf32>, vector<4x64xf32>, vector<2x64xf32> -> vector<2x64xf32>
    %c0_109 = arith.constant 0 : index
    %c0_110 = arith.constant 0 : index
    %c0_111 = arith.constant 0 : index
    %109 = vector.load %arg11[%c0_109, %c0_110, %c0_111] : memref<2x64x32xf32, #tpu.memory_space<vmem>>, vector<1x64x32xf32>
    %110 = vector.shape_cast %109 : vector<1x64x32xf32> to vector<64x32xf32>
    %cst_112 = arith.constant dense<0.000000e+00> : vector<2x32xf32>
    %111 = tpu.matmul %108, %110, %cst_112 {dimension_numbers = #tpu.dot_dimension_numbers<[1], [0], [0], [1], [0, 0, 1, 1], [], []>} : vector<2x64xf32>, vector<64x32xf32>, vector<2x32xf32> -> vector<2x32xf32>
    %c1_113 = arith.constant 1 : index
    %c0_114 = arith.constant 0 : index
    %c0_115 = arith.constant 0 : index
    %112 = vector.load %arg10[%c1_113, %c0_114, %c0_115] : memref<2x2x4xf32, #tpu.memory_space<vmem>>, vector<1x2x4xf32>
    %113 = vector.shape_cast %112 : vector<1x2x4xf32> to vector<2x4xf32>
    %cst_116 = arith.constant dense<0.000000e+00> : vector<2x64xf32>
    %114 = tpu.matmul %113, %105, %cst_116 {dimension_numbers = #tpu.dot_dimension_numbers<[1], [0], [0], [1], [0, 0, 1, 1], [], []>} : vector<2x4xf32>, vector<4x64xf32>, vector<2x64xf32> -> vector<2x64xf32>
    %c1_117 = arith.constant 1 : index
    %c0_118 = arith.constant 0 : index
    %c0_119 = arith.constant 0 : index
    %115 = vector.load %arg11[%c1_117, %c0_118, %c0_119] : memref<2x64x32xf32, #tpu.memory_space<vmem>>, vector<1x64x32xf32>
    %116 = vector.shape_cast %115 : vector<1x64x32xf32> to vector<64x32xf32>
    %cst_120 = arith.constant dense<0.000000e+00> : vector<2x32xf32>
    %117 = tpu.matmul %114, %116, %cst_120 {dimension_numbers = #tpu.dot_dimension_numbers<[1], [0], [0], [1], [0, 0, 1, 1], [], []>} : vector<2x64xf32>, vector<64x32xf32>, vector<2x32xf32> -> vector<2x32xf32>
    %118 = arith.addf %111, %117 : vector<2x32xf32>
    %c0_121 = arith.constant 0 : index
    %c0_122 = arith.constant 0 : index
    %119 = vector.load %arg12[%c0_121, %c0_122] : memref<1x32xf32, #tpu.memory_space<vmem>>, vector<1x32xf32>
    %120 = vector.broadcast %119 : vector<1x32xf32> to vector<2x32xf32>
    %121 = arith.addf %118, %120 : vector<2x32xf32>
    %cst_123 = arith.constant 0.000000e+00 : f32
    %122 = vector.broadcast %cst_123 : f32 to vector<2x32xf32>
    %123 = arith.cmpf oge, %121, %122 : vector<2x32xf32>
    %cst_124 = arith.constant 2.000000e-01 : f32
    %124 = vector.broadcast %cst_124 : f32 to vector<2x32xf32>
    %125 = arith.mulf %124, %121 : vector<2x32xf32>
    %126 = arith.select %123, %121, %125 : vector<2x32xi1>, vector<2x32xf32>
    %c0_125 = arith.constant 0 : index
    %c0_126 = arith.constant 0 : index
    %127 = vector.load %arg13[%c0_125, %c0_126] : memref<32x16xf32, #tpu.memory_space<vmem>>, vector<32x16xf32>
    %cst_127 = arith.constant dense<0.000000e+00> : vector<2x16xf32>
    %128 = tpu.matmul %126, %127, %cst_127 {dimension_numbers = #tpu.dot_dimension_numbers<[1], [0], [0], [1], [0, 0, 1, 1], [], []>} : vector<2x32xf32>, vector<32x16xf32>, vector<2x16xf32> -> vector<2x16xf32>
    %c0_128 = arith.constant 0 : index
    %c0_129 = arith.constant 0 : index
    %129 = vector.load %arg14[%c0_128, %c0_129] : memref<1x16xf32, #tpu.memory_space<vmem>>, vector<1x16xf32>
    %130 = vector.broadcast %129 : vector<1x16xf32> to vector<2x16xf32>
    %131 = arith.addf %128, %130 : vector<2x16xf32>
    %c0_130 = arith.constant 0 : index
    %c0_131 = arith.constant 0 : index
    %132 = vector.load %arg15[%c0_130, %c0_131] : memref<2x16xf32, #tpu.memory_space<vmem>>, vector<2x16xf32>
    tpu.vector_store %arg15[%c0_130, %c0_131], %131 {strides = array<i32>} : memref<2x16xf32, #tpu.memory_space<vmem>>, vector<2x16xf32>,
    return
  }
}

</mosaic_0001>

<llo_original>
// kernel: net1_forward.1
$region0: #{net1_forward.1}
  #allocation0 [shape = 'u32[]', space=smem, size = 0x4, offset = 0x4, fixed_abs, tag = 'smem constant byte address 0x4 - core index']
  #allocation1 [shape = 'u32[144,128]{1,0:T(1,128)}', space=vmem, size = 0x12000, scoped, tag = 'internal scratch']
  %s0 = inlined_call_operand.vmem [shape: f32[32,64], index: 0, kind: input, shape index: {}]
  %s1 = inlined_call_operand.hbm [shape: f32[4,16,32], index: 1, kind: input, shape index: {}]
  %s2 = inlined_call_operand.vmem [shape: f32[4,64,64], index: 2, kind: input, shape index: {}]
  %s3 = inlined_call_operand.vmem [shape: f32[1,64], index: 3, kind: input, shape index: {}]
  %s4 = inlined_call_operand.hbm [shape: f32[4,8,16], index: 4, kind: input, shape index: {}]
  %s5 = inlined_call_operand.vmem [shape: f32[4,64,64], index: 5, kind: input, shape index: {}]
  %s6 = inlined_call_operand.vmem [shape: f32[1,64], index: 6, kind: input, shape index: {}]
  %s7 = inlined_call_operand.hbm [shape: f32[4,4,8], index: 7, kind: input, shape index: {}]
  %s8 = inlined_call_operand.vmem [shape: f32[4,64,64], index: 8, kind: input, shape index: {}]
  %s9 = inlined_call_operand.vmem [shape: f32[1,64], index: 9, kind: input, shape index: {}]
  %s10 = inlined_call_operand.vmem [shape: f32[2,2,4], index: 10, kind: input, shape index: {}]
  %s11 = inlined_call_operand.vmem [shape: f32[2,64,32], index: 11, kind: input, shape index: {}]
  %s12 = inlined_call_operand.vmem [shape: f32[1,32], index: 12, kind: input, shape index: {}]
  %s13 = inlined_call_operand.vmem [shape: f32[32,16], index: 13, kind: input, shape index: {}]
  %s14 = inlined_call_operand.vmem [shape: f32[1,16], index: 14, kind: input, shape index: {}]
  %s15 = inlined_call_operand.hbm [shape: f32[2,16], index: 15, kind: output, shape index: {}]
  %s16 = sld [smem:[#allocation0]]
  $region82: #{net1_forward.1} parent=0
    _
  %s18 = ssub.s32 1, %s16
  %s19 = scalar_select 0, %s18, %s16
  $region1: #{net1_forward.1} parent=0
    #allocation2 [shape = 'u8[32768]{0}', space=vmem, size = 0x8000, scoped, tag = 'input window, operand 1, single buffered']
    #allocation3 [shape = 's32[1]{0}', space=sflag, size = 0x4, scoped, tag = 'scoped memory for net1_forward.1']
    #allocation4 [shape = 's32[1]{0}', space=sflag, size = 0x4, scoped, tag = 'scoped memory for net1_forward.1']
    #allocation5 [shape = 'u8[16384]{0}', space=vmem, size = 0x4000, scoped, tag = 'input window, operand 4, single buffered']
    #allocation6 [shape = 's32[1]{0}', space=sflag, size = 0x4, scoped, tag = 'scoped memory for net1_forward.1']
    #allocation7 [shape = 'u8[8192]{0}', space=vmem, size = 0x2000, scoped, tag = 'input window, operand 7, single buffered']
    #allocation8 [shape = 'u8[1024]{0}', space=vmem, size = 0x400, scoped, tag = 'output window, operand 0, single buffered']
    %20 = vsyncpa [#allocation3], 0
    %21 = vsyncpa [#allocation6], 0
    %22 = vsyncpa [#allocation4], 0
    // Predicated region
    $region2: #{net1_forward.1} parent=1 // pred_check
      _
    $region3: #{net1_forward.1} parent=1 // pred_check_branch
      %24 = sbr.rel (0) target = $region5
    $region4: #{net1_forward.1} parent=1 // pred_region
      _
    $region5: #{net1_forward.1} parent=1 // pred_fallthru
      _
    // Predicated region
    $region6: #{net1_forward.1} parent=1 // pred_check
      _
    $region7: #{net1_forward.1} parent=1 // pred_check_branch
      %26 = sbr.rel (0) target = $region9
    $region8: #{net1_forward.1} parent=1 // pred_region
      %s28 = ssub.s32 1024, 1024
      %29 = vsyncadd [#allocation3], %s28
      %s30 = sshll.u32 [#allocation2], 4
      %s31 = int_to_ptr.vmem [resolvable:$true] %s30
      %36 = dma.hbm_to_vmem [thread:$0]  %s1, 1024, %s31, [#allocation3], 128, 128, 8
    $region9: #{net1_forward.1} parent=1 // pred_fallthru
      _
    // Predicated region
    $region10: #{net1_forward.1} parent=1 // pred_check
      _
    $region11: #{net1_forward.1} parent=1 // pred_check_branch
      %38 = sbr.rel (0) target = $region13
    $region12: #{net1_forward.1} parent=1 // pred_region
      _
    $region13: #{net1_forward.1} parent=1 // pred_fallthru
      _
    // Predicated region
    $region14: #{net1_forward.1} parent=1 // pred_check
      _
    $region15: #{net1_forward.1} parent=1 // pred_check_branch
      %40 = sbr.rel (0) target = $region17
    $region16: #{net1_forward.1} parent=1 // pred_region
      _
    $region17: #{net1_forward.1} parent=1 // pred_fallthru
      _
    // Predicated region
    $region18: #{net1_forward.1} parent=1 // pred_check
      _
    $region19: #{net1_forward.1} parent=1 // pred_check_branch
      %42 = sbr.rel (0) target = $region21
    $region20: #{net1_forward.1} parent=1 // pred_region
      %s44 = ssub.s32 512, 512
      %45 = vsyncadd [#allocation6], %s44
      %s46 = sshll.u32 [#allocation5], 4
      %s47 = int_to_ptr.vmem [resolvable:$true] %s46
      %52 = dma.hbm_to_vmem [thread:$0]  %s4, 512, %s47, [#allocation6], 128, 128, 8
    $region21: #{net1_forward.1} parent=1 // pred_fallthru
      _
    // Predicated region
    $region22: #{net1_forward.1} parent=1 // pred_check
      _
    $region23: #{net1_forward.1} parent=1 // pred_check_branch
      %54 = sbr.rel (0) target = $region25
    $region24: #{net1_forward.1} parent=1 // pred_region
      _
    $region25: #{net1_forward.1} parent=1 // pred_fallthru
      _
    // Predicated region
    $region26: #{net1_forward.1} parent=1 // pred_check
      _
    $region27: #{net1_forward.1} parent=1 // pred_check_branch
      %56 = sbr.rel (0) target = $region29
    $region28: #{net1_forward.1} parent=1 // pred_region
      _
    $region29: #{net1_forward.1} parent=1 // pred_fallthru
      _
    // Predicated region
    $region30: #{net1_forward.1} parent=1 // pred_check
      _
    $region31: #{net1_forward.1} parent=1 // pred_check_branch
      %58 = sbr.rel (0) target = $region33
    $region32: #{net1_forward.1} parent=1 // pred_region
      %s60 = ssub.s32 256, 256
      %61 = vsyncadd [#allocation6], %s60
      %s62 = sshll.u32 [#allocation7], 4
      %s63 = int_to_ptr.vmem [resolvable:$true] %s62
      %68 = dma.hbm_to_vmem [thread:$0]  %s7, 256, %s63, [#allocation6], 64, 64, 4
    $region33: #{net1_forward.1} parent=1 // pred_fallthru
      _
    // Predicated region
    $region34: #{net1_forward.1} parent=1 // pred_check
      _
    $region35: #{net1_forward.1} parent=1 // pred_check_branch
      %70 = sbr.rel (0) target = $region37
    $region36: #{net1_forward.1} parent=1 // pred_region
      _
    $region37: #{net1_forward.1} parent=1 // pred_fallthru
      _
    // Predicated region
    $region38: #{net1_forward.1} parent=1 // pred_check
      _
    $region39: #{net1_forward.1} parent=1 // pred_check_branch
      %72 = sbr.rel (0) target = $region41
    $region40: #{net1_forward.1} parent=1 // pred_region
      _
    $region41: #{net1_forward.1} parent=1 // pred_fallthru
      _
    // Predicated region
    $region42: #{net1_forward.1} parent=1 // pred_check
      _
    $region43: #{net1_forward.1} parent=1 // pred_check_branch
      %74 = sbr.rel (0) target = $region45
    $region44: #{net1_forward.1} parent=1 // pred_region
      _
    $region45: #{net1_forward.1} parent=1 // pred_fallthru
      _
    // Predicated region
    $region46: #{net1_forward.1} parent=1 // pred_check
      _
    $region47: #{net1_forward.1} parent=1 // pred_check_branch
      %76 = sbr.rel (0) target = $region49
    $region48: #{net1_forward.1} parent=1 // pred_region
      _
    $region49: #{net1_forward.1} parent=1 // pred_fallthru
      _
    // Predicated region
    $region50: #{net1_forward.1} parent=1 // pred_check
      _
    $region51: #{net1_forward.1} parent=1 // pred_check_branch
      %78 = sbr.rel (0) target = $region53
    $region52: #{net1_forward.1} parent=1 // pred_region
      _
    $region53: #{net1_forward.1} parent=1 // pred_fallthru
      _
    // Predicated region
    $region54: #{net1_forward.1} parent=1 // pred_check
      _
    $region55: #{net1_forward.1} parent=1 // pred_check_branch
      %80 = sbr.rel (0) target = $region57
    $region56: #{net1_forward.1} parent=1 // pred_region
      _
    $region57: #{net1_forward.1} parent=1 // pred_fallthru
      _
    // Predicated region
    $region58: #{net1_forward.1} parent=1 // pred_check
      _
    $region59: #{net1_forward.1} parent=1 // pred_check_branch
      %82 = sbr.rel (0) target = $region61
    $region60: #{net1_forward.1} parent=1 // pred_region
      _
    $region61: #{net1_forward.1} parent=1 // pred_fallthru
      _
    // Predicated region
    $region62: #{net1_forward.1} parent=1 // pred_check
      _
    $region63: #{net1_forward.1} parent=1 // pred_check_branch
      %84 = sbr.rel (0) target = $region65
    $region64: #{net1_forward.1} parent=1 // pred_region
      %85 = dma.done [#allocation3], 1024
    $region65: #{net1_forward.1} parent=1 // pred_fallthru
      _
    // Predicated region
    $region66: #{net1_forward.1} parent=1 // pred_check
      _
    $region67: #{net1_forward.1} parent=1 // pred_check_branch
      %87 = sbr.rel (0) target = $region69
    $region68: #{net1_forward.1} parent=1 // pred_region
      %88 = dma.done [#allocation6], 512
    $region69: #{net1_forward.1} parent=1 // pred_fallthru
      _
    // Predicated region
    $region70: #{net1_forward.1} parent=1 // pred_check
      _
    $region71: #{net1_forward.1} parent=1 // pred_check_branch
      %90 = sbr.rel (0) target = $region73
    $region72: #{net1_forward.1} parent=1 // pred_region
      %91 = dma.done [#allocation6], 256
    $region73: #{net1_forward.1} parent=1 // pred_fallthru
      _
    %v92 = vld [vmem:[%s0] sm:$0xff]
    %v93 = vld [vmem:[%s0 + $0x8] sm:$0xff]
    %v94 = vld [vmem:[%s0 + $0x10] sm:$0xff]
    %v95 = vld [vmem:[%s0 + $0x18] sm:$0xff]
    %v96 = vld [vmem:[#allocation2] sm:$0xff]
    %v97 = vld [vmem:[#allocation2 + $0x8] sm:$0xff]
    %vm98 = vcmask 261120
    %v100 = vsel %vm98, %v96, 0
    %v103 = vsel %vm98, %v97, 0
    %105 = vmatprep.subr.mxu0 0.0
    %106 = vmatpush1.msra.mxu0 0.0
    %107 = vmatprep.subr.mxu0 0.0
    %108 = vmatpush1.msra.mxu0 0.0
    %109 = vmatprep.subr.mxu0 0.0
    %110 = vmatpush1.msra.mxu0 0.0
    %111 = vmatprep.subr.mxu0 0.0
    %112 = vmatpush1.msra.mxu0 0.0
    %113 = vmatprep.subr.mxu0 0.0
    %114 = vmatpush1.msra.mxu0 0.0
    %115 = vmatprep.subr.mxu0 0.0
    %116 = vmatpush1.msra.mxu0 0.0
    %117 = vmatprep.subr.mxu0 0.0
    %118 = vmatpush1.msra.mxu0 0.0
    %119 = vmatprep.subr.mxu0 0.0
    %120 = vmatpush1.msra.mxu0 0.0
    %121 = vmatprep.subr.mxu0 0.0
    %122 = vmatpush1.msra.mxu0 0.0
    %123 = vmatprep.subr.mxu0 0.0
    %124 = vmatpush1.msra.mxu0 0.0
    %125 = vmatprep.subr.mxu0 0.0
    %126 = vmatpush1.msra.mxu0 0.0
    %127 = vmatprep.subr.mxu0 0.0
    %128 = vmatpush1.msra.mxu0 0.0
    %129 = vmatprep.subr.mxu0 0.0
    %130 = vmatpush1.msra.mxu0 %v95
    %131 = vmatprep.subr.mxu0 0.0
    %132 = vmatpush1.msra.mxu0 %v94
    %133 = vmatprep.subr.mxu0 0.0
    %134 = vmatpush1.msra.mxu0 %v93
    %135 = vmatprep.subr.mxu0 0.0
    %136 = vmatpush1.msra.mxu0 %v92
    %137 = vmatprep.subr.mxu0 0.0
    %138 = vmatpush2.msra.mxu0 0.0
    %139 = vmatprep.subr.mxu0 0.0
    %140 = vmatpush2.msra.mxu0 0.0
    %141 = vmatprep.subr.mxu0 0.0
    %142 = vmatpush2.msra.mxu0 0.0
    %143 = vmatprep.subr.mxu0 0.0
    %144 = vmatpush2.msra.mxu0 0.0
    %145 = vmatprep.subr.mxu0 0.0
    %146 = vmatpush2.msra.mxu0 0.0
    %147 = vmatprep.subr.mxu0 0.0
    %148 = vmatpush2.msra.mxu0 0.0
    %149 = vmatprep.subr.mxu0 0.0
    %150 = vmatpush2.msra.mxu0 0.0
    %151 = vmatprep.subr.mxu0 0.0
    %152 = vmatpush2.msra.mxu0 0.0
    %153 = vmatprep.subr.mxu0 0.0
    %154 = vmatpush2.msra.mxu0 0.0
    %155 = vmatprep.subr.mxu0 0.0
    %156 = vmatpush2.msra.mxu0 0.0
    %157 = vmatprep.subr.mxu0 0.0
    %158 = vmatpush2.msra.mxu0 0.0
    %159 = vmatprep.subr.mxu0 0.0
    %160 = vmatpush2.msra.mxu0 0.0
    %161 = vmatprep.subr.mxu0 0.0
    %162 = vmatpush2.msra.mxu0 0.0
    %163 = vmatprep.subr.mxu0 0.0
    %164 = vmatpush2.msra.mxu0 0.0
    %165 = vmatprep.subr.mxu0 0.0
    %166 = vmatpush2.msra.mxu0 0.0
    %167 = vmatprep.subr.mxu0 0.0
    %168 = vmatpush2.msra.mxu0 0.0
    %169 = vmatprep.mubr.f32.mxu0 0.0
    %170 = vmatmul.mubr.f32.gmra.mxu0 %v100
    %v171 = vpop.f32.mrf.mxu0
    %v172 = vadd.f32 0.0, %v171
    %v173 = vpop.f32.mrf.mxu0
    %174 = vmatprep.mubr.f32.mxu0 0.0
    %175 = vmatmul.mubr.f32.gmra.mxu0 %v103
    %v176 = vpop.f32.mrf.mxu0
    %v177 = vadd.f32 0.0, %v176
    %v178 = vpop.f32.mrf.mxu0
    %179 = vdwg.mxu0
    %v180 = vld [vmem:[%s2] sm:$0xff]
    %v181 = vld [vmem:[%s2 + $0x8] sm:$0xff]
    %v182 = vld [vmem:[%s2 + $0x10] sm:$0xff]
    %v183 = vld [vmem:[%s2 + $0x18] sm:$0xff]
    %v184 = vld [vmem:[%s2 + $0x20] sm:$0xff]
    %v185 = vld [vmem:[%s2 + $0x28] sm:$0xff]
    %v186 = vld [vmem:[%s2 + $0x30] sm:$0xff]
    %v187 = vld [vmem:[%s2 + $0x38] sm:$0xff]
    %s188 = scalar_lea.vmem [#allocation2], 16
    %v189 = vld [vmem:[%s188] sm:$0xff]
    %v190 = vld [vmem:[%s188 + $0x8] sm:$0xff]
    %v192 = vsel %vm98, %v189, 0
    %v195 = vsel %vm98, %v190, 0
    %197 = vmatprep.subr.mxu0 0.0
    %198 = vmatpush1.msra.mxu0 0.0
    %199 = vmatprep.subr.mxu0 0.0
    %200 = vmatpush1.msra.mxu0 0.0
    %201 = vmatprep.subr.mxu0 0.0
    %202 = vmatpush1.msra.mxu0 0.0
    %203 = vmatprep.subr.mxu0 0.0
    %204 = vmatpush1.msra.mxu0 0.0
    %205 = vmatprep.subr.mxu0 0.0
    %206 = vmatpush1.msra.mxu0 0.0
    %207 = vmatprep.subr.mxu0 0.0
    %208 = vmatpush1.msra.mxu0 0.0
    %209 = vmatprep.subr.mxu0 0.0
    %210 = vmatpush1.msra.mxu0 0.0
    %211 = vmatprep.subr.mxu0 0.0
    %212 = vmatpush1.msra.mxu0 0.0
    %213 = vmatprep.subr.mxu0 0.0
    %214 = vmatpush1.msra.mxu0 0.0
    %215 = vmatprep.subr.mxu0 0.0
    %216 = vmatpush1.msra.mxu0 0.0
    %217 = vmatprep.subr.mxu0 0.0
    %218 = vmatpush1.msra.mxu0 0.0
    %219 = vmatprep.subr.mxu0 0.0
    %220 = vmatpush1.msra.mxu0 0.0
    %221 = vmatprep.subr.mxu0 0.0
    %222 = vmatpush1.msra.mxu0 %v95
    %223 = vmatprep.subr.mxu0 0.0
    %224 = vmatpush1.msra.mxu0 %v94
    %225 = vmatprep.subr.mxu0 0.0
    %226 = vmatpush1.msra.mxu0 %v93
    %227 = vmatprep.subr.mxu0 0.0
    %228 = vmatpush1.msra.mxu0 %v92
    %229 = vmatprep.subr.mxu0 0.0
    %230 = vmatpush2.msra.mxu0 0.0
    %231 = vmatprep.subr.mxu0 0.0
    %232 = vmatpush2.msra.mxu0 0.0
    %233 = vmatprep.subr.mxu0 0.0
    %234 = vmatpush2.msra.mxu0 0.0
    %235 = vmatprep.subr.mxu0 0.0
    %236 = vmatpush2.msra.mxu0 0.0
    %237 = vmatprep.subr.mxu0 0.0
    %238 = vmatpush2.msra.mxu0 0.0
    %239 = vmatprep.subr.mxu0 0.0
    %240 = vmatpush2.msra.mxu0 0.0
    %241 = vmatprep.subr.mxu0 0.0
    %242 = vmatpush2.msra.mxu0 0.0
    %243 = vmatprep.subr.mxu0 0.0
    %244 = vmatpush2.msra.mxu0 0.0
    %245 = vmatprep.subr.mxu0 0.0
    %246 = vmatpush2.msra.mxu0 0.0
    %247 = vmatprep.subr.mxu0 0.0
    %248 = vmatpush2.msra.mxu0 0.0
    %249 = vmatprep.subr.mxu0 0.0
    %250 = vmatpush2.msra.mxu0 0.0
    %251 = vmatprep.subr.mxu0 0.0
    %252 = vmatpush2.msra.mxu0 0.0
    %253 = vmatprep.subr.mxu0 0.0
    %254 = vmatpush2.msra.mxu0 0.0
    %255 = vmatprep.subr.mxu0 0.0
    %256 = vmatpush2.msra.mxu0 0.0
    %257 = vmatprep.subr.mxu0 0.0
    %258 = vmatpush2.msra.mxu0 0.0
    %259 = vmatprep.subr.mxu0 0.0
    %260 = vmatpush2.msra.mxu0 0.0
    %261 = vmatprep.mubr.f32.mxu0 0.0
    %262 = vmatmul.mubr.f32.gmra.mxu0 %v192
    %v263 = vpop.f32.mrf.mxu0
    %v264 = vadd.f32 0.0, %v263
    %v265 = vpop.f32.mrf.mxu0
    %266 = vmatprep.mubr.f32.mxu0 0.0
    %267 = vmatmul.mubr.f32.gmra.mxu0 %v195
    %v268 = vpop.f32.mrf.mxu0
    %v269 = vadd.f32 0.0, %v268
    %v270 = vpop.f32.mrf.mxu0
    %271 = vdwg.mxu0
    %s272 = scalar_lea.vmem %s2, 64
    %v273 = vld [vmem:[%s272] sm:$0xff]
    %v274 = vld [vmem:[%s272 + $0x8] sm:$0xff]
    %v275 = vld [vmem:[%s272 + $0x10] sm:$0xff]
    %v276 = vld [vmem:[%s272 + $0x18] sm:$0xff]
    %v277 = vld [vmem:[%s272 + $0x20] sm:$0xff]
    %v278 = vld [vmem:[%s272 + $0x28] sm:$0xff]
    %v279 = vld [vmem:[%s272 + $0x30] sm:$0xff]
    %v280 = vld [vmem:[%s272 + $0x38] sm:$0xff]
    %vm281 = vcmask 523264
    %v283 = vsel %vm281, %v264, 0
    %v286 = vsel %vm281, %v269, 0
    %288 = vmatprep.subr.mxu0 0.0
    %289 = vmatpush1.msra.mxu0 0.0
    %290 = vmatprep.subr.mxu0 0.0
    %291 = vmatpush1.msra.mxu0 0.0
    %292 = vmatprep.subr.mxu0 0.0
    %293 = vmatpush1.msra.mxu0 0.0
    %294 = vmatprep.subr.mxu0 0.0
    %295 = vmatpush1.msra.mxu0 0.0
    %296 = vmatprep.subr.mxu0 0.0
    %297 = vmatpush1.msra.mxu0 0.0
    %298 = vmatprep.subr.mxu0 0.0
    %299 = vmatpush1.msra.mxu0 0.0
    %300 = vmatprep.subr.mxu0 0.0
    %301 = vmatpush1.msra.mxu0 0.0
    %302 = vmatprep.subr.mxu0 0.0
    %303 = vmatpush1.msra.mxu0 0.0
    %304 = vmatprep.subr.mxu0 0.0
    %305 = vmatpush1.msra.mxu0 %v280
    %306 = vmatprep.subr.mxu0 0.0
    %307 = vmatpush1.msra.mxu0 %v279
    %308 = vmatprep.subr.mxu0 0.0
    %309 = vmatpush1.msra.mxu0 %v278
    %310 = vmatprep.subr.mxu0 0.0
    %311 = vmatpush1.msra.mxu0 %v277
    %312 = vmatprep.subr.mxu0 0.0
    %313 = vmatpush1.msra.mxu0 %v276
    %314 = vmatprep.subr.mxu0 0.0
    %315 = vmatpush1.msra.mxu0 %v275
    %316 = vmatprep.subr.mxu0 0.0
    %317 = vmatpush1.msra.mxu0 %v274
    %318 = vmatprep.subr.mxu0 0.0
    %319 = vmatpush1.msra.mxu0 %v273
    %320 = vmatprep.subr.mxu0 0.0
    %321 = vmatpush2.msra.mxu0 0.0
    %322 = vmatprep.subr.mxu0 0.0
    %323 = vmatpush2.msra.mxu0 0.0
    %324 = vmatprep.subr.mxu0 0.0
    %325 = vmatpush2.msra.mxu0 0.0
    %326 = vmatprep.subr.mxu0 0.0
    %327 = vmatpush2.msra.mxu0 0.0
    %328 = vmatprep.subr.mxu0 0.0
    %329 = vmatpush2.msra.mxu0 0.0
    %330 = vmatprep.subr.mxu0 0.0
    %331 = vmatpush2.msra.mxu0 0.0
    %332 = vmatprep.subr.mxu0 0.0
    %333 = vmatpush2.msra.mxu0 0.0
    %334 = vmatprep.subr.mxu0 0.0
    %335 = vmatpush2.msra.mxu0 0.0
    %336 = vmatprep.subr.mxu0 0.0
    %337 = vmatpush2.msra.mxu0 0.0
    %338 = vmatprep.subr.mxu0 0.0
    %339 = vmatpush2.msra.mxu0 0.0
    %340 = vmatprep.subr.mxu0 0.0
    %341 = vmatpush2.msra.mxu0 0.0
    %342 = vmatprep.subr.mxu0 0.0
    %343 = vmatpush2.msra.mxu0 0.0
    %344 = vmatprep.subr.mxu0 0.0
    %345 = vmatpush2.msra.mxu0 0.0
    %346 = vmatprep.subr.mxu0 0.0
    %347 = vmatpush2.msra.mxu0 0.0
    %348 = vmatprep.subr.mxu0 0.0
    %349 = vmatpush2.msra.mxu0 0.0
    %350 = vmatprep.subr.mxu0 0.0
    %351 = vmatpush2.msra.mxu0 0.0
    %352 = vmatprep.mubr.f32.mxu0 0.0
    %353 = vmatmul.mubr.f32.gmra.mxu0 %v283
    %v354 = vpop.f32.mrf.mxu0
    %v355 = vadd.f32 0.0, %v354
    %v356 = vpop.f32.mrf.mxu0
    %357 = vmatprep.mubr.f32.mxu0 0.0
    %358 = vmatmul.mubr.f32.gmra.mxu0 %v286
    %v359 = vpop.f32.mrf.mxu0
    %v360 = vadd.f32 0.0, %v359
    %v361 = vpop.f32.mrf.mxu0
    %362 = vdwg.mxu0
    %v364 = vsel %vm281, %v172, 0
    %v367 = vsel %vm281, %v177, 0
    %369 = vmatprep.subr.mxu0 0.0
    %370 = vmatpush1.msra.mxu0 0.0
    %371 = vmatprep.subr.mxu0 0.0
    %372 = vmatpush1.msra.mxu0 0.0
    %373 = vmatprep.subr.mxu0 0.0
    %374 = vmatpush1.msra.mxu0 0.0
    %375 = vmatprep.subr.mxu0 0.0
    %376 = vmatpush1.msra.mxu0 0.0
    %377 = vmatprep.subr.mxu0 0.0
    %378 = vmatpush1.msra.mxu0 0.0
    %379 = vmatprep.subr.mxu0 0.0
    %380 = vmatpush1.msra.mxu0 0.0
    %381 = vmatprep.subr.mxu0 0.0
    %382 = vmatpush1.msra.mxu0 0.0
    %383 = vmatprep.subr.mxu0 0.0
    %384 = vmatpush1.msra.mxu0 0.0
    %385 = vmatprep.subr.mxu0 0.0
    %386 = vmatpush1.msra.mxu0 %v187
    %387 = vmatprep.subr.mxu0 0.0
    %388 = vmatpush1.msra.mxu0 %v186
    %389 = vmatprep.subr.mxu0 0.0
    %390 = vmatpush1.msra.mxu0 %v185
    %391 = vmatprep.subr.mxu0 0.0
    %392 = vmatpush1.msra.mxu0 %v184
    %393 = vmatprep.subr.mxu0 0.0
    %394 = vmatpush1.msra.mxu0 %v183
    %395 = vmatprep.subr.mxu0 0.0
    %396 = vmatpush1.msra.mxu0 %v182
    %397 = vmatprep.subr.mxu0 0.0
    %398 = vmatpush1.msra.mxu0 %v181
    %399 = vmatprep.subr.mxu0 0.0
    %400 = vmatpush1.msra.mxu0 %v180
    %401 = vmatprep.subr.mxu0 0.0
    %402 = vmatpush2.msra.mxu0 0.0
    %403 = vmatprep.subr.mxu0 0.0
    %404 = vmatpush2.msra.mxu0 0.0
    %405 = vmatprep.subr.mxu0 0.0
    %406 = vmatpush2.msra.mxu0 0.0
    %407 = vmatprep.subr.mxu0 0.0
    %408 = vmatpush2.msra.mxu0 0.0
    %409 = vmatprep.subr.mxu0 0.0
    %410 = vmatpush2.msra.mxu0 0.0
    %411 = vmatprep.subr.mxu0 0.0
    %412 = vmatpush2.msra.mxu0 0.0
    %413 = vmatprep.subr.mxu0 0.0
    %414 = vmatpush2.msra.mxu0 0.0
    %415 = vmatprep.subr.mxu0 0.0
    %416 = vmatpush2.msra.mxu0 0.0
    %417 = vmatprep.subr.mxu0 0.0
    %418 = vmatpush2.msra.mxu0 0.0
    %419 = vmatprep.subr.mxu0 0.0
    %420 = vmatpush2.msra.mxu0 0.0
    %421 = vmatprep.subr.mxu0 0.0
    %422 = vmatpush2.msra.mxu0 0.0
    %423 = vmatprep.subr.mxu0 0.0
    %424 = vmatpush2.msra.mxu0 0.0
    %425 = vmatprep.subr.mxu0 0.0
    %426 = vmatpush2.msra.mxu0 0.0
    %427 = vmatprep.subr.mxu0 0.0
    %428 = vmatpush2.msra.mxu0 0.0
    %429 = vmatprep.subr.mxu0 0.0
    %430 = vmatpush2.msra.mxu0 0.0
    %431 = vmatprep.subr.mxu0 0.0
    %432 = vmatpush2.msra.mxu0 0.0
    %433 = vmatprep.mubr.f32.mxu0 0.0
    %434 = vmatmul.mubr.f32.gmra.mxu0 %v364
    %v435 = vpop.f32.mrf.mxu0
    %v436 = vadd.f32 %v355, %v435
    %v437 = vpop.f32.mrf.mxu0
    %438 = vmatprep.mubr.f32.mxu0 0.0
    %439 = vmatmul.mubr.f32.gmra.mxu0 %v367
    %v440 = vpop.f32.mrf.mxu0
    %v441 = vadd.f32 %v360, %v440
    %v442 = vpop.f32.mrf.mxu0
    %443 = vdwg.mxu0
    %s444 = scalar_lea.vmem [#allocation2], 32
    %v445 = vld [vmem:[%s444] sm:$0xff]
    %v446 = vld [vmem:[%s444 + $0x8] sm:$0xff]
    %v448 = vsel %vm98, %v445, 0
    %v451 = vsel %vm98, %v446, 0
    %453 = vmatprep.subr.mxu0 0.0
    %454 = vmatpush1.msra.mxu0 0.0
    %455 = vmatprep.subr.mxu0 0.0
    %456 = vmatpush1.msra.mxu0 0.0
    %457 = vmatprep.subr.mxu0 0.0
    %458 = vmatpush1.msra.mxu0 0.0
    %459 = vmatprep.subr.mxu0 0.0
    %460 = vmatpush1.msra.mxu0 0.0
    %461 = vmatprep.subr.mxu0 0.0
    %462 = vmatpush1.msra.mxu0 0.0
    %463 = vmatprep.subr.mxu0 0.0
    %464 = vmatpush1.msra.mxu0 0.0
    %465 = vmatprep.subr.mxu0 0.0
    %466 = vmatpush1.msra.mxu0 0.0
    %467 = vmatprep.subr.mxu0 0.0
    %468 = vmatpush1.msra.mxu0 0.0
    %469 = vmatprep.subr.mxu0 0.0
    %470 = vmatpush1.msra.mxu0 0.0
    %471 = vmatprep.subr.mxu0 0.0
    %472 = vmatpush1.msra.mxu0 0.0
    %473 = vmatprep.subr.mxu0 0.0
    %474 = vmatpush1.msra.mxu0 0.0
    %475 = vmatprep.subr.mxu0 0.0
    %476 = vmatpush1.msra.mxu0 0.0
    %477 = vmatprep.subr.mxu0 0.0
    %478 = vmatpush1.msra.mxu0 %v95
    %479 = vmatprep.subr.mxu0 0.0
    %480 = vmatpush1.msra.mxu0 %v94
    %481 = vmatprep.subr.mxu0 0.0
    %482 = vmatpush1.msra.mxu0 %v93
    %483 = vmatprep.subr.mxu0 0.0
    %484 = vmatpush1.msra.mxu0 %v92
    %485 = vmatprep.subr.mxu0 0.0
    %486 = vmatpush2.msra.mxu0 0.0
    %487 = vmatprep.subr.mxu0 0.0
    %488 = vmatpush2.msra.mxu0 0.0
    %489 = vmatprep.subr.mxu0 0.0
    %490 = vmatpush2.msra.mxu0 0.0
    %491 = vmatprep.subr.mxu0 0.0
    %492 = vmatpush2.msra.mxu0 0.0
    %493 = vmatprep.subr.mxu0 0.0
    %494 = vmatpush2.msra.mxu0 0.0
    %495 = vmatprep.subr.mxu0 0.0
    %496 = vmatpush2.msra.mxu0 0.0
    %497 = vmatprep.subr.mxu0 0.0
    %498 = vmatpush2.msra.mxu0 0.0
    %499 = vmatprep.subr.mxu0 0.0
    %500 = vmatpush2.msra.mxu0 0.0
    %501 = vmatprep.subr.mxu0 0.0
    %502 = vmatpush2.msra.mxu0 0.0
    %503 = vmatprep.subr.mxu0 0.0
    %504 = vmatpush2.msra.mxu0 0.0
    %505 = vmatprep.subr.mxu0 0.0
    %506 = vmatpush2.msra.mxu0 0.0
    %507 = vmatprep.subr.mxu0 0.0
    %508 = vmatpush2.msra.mxu0 0.0
    %509 = vmatprep.subr.mxu0 0.0
    %510 = vmatpush2.msra.mxu0 0.0
    %511 = vmatprep.subr.mxu0 0.0
    %512 = vmatpush2.msra.mxu0 0.0
    %513 = vmatprep.subr.mxu0 0.0
    %514 = vmatpush2.msra.mxu0 0.0
    %515 = vmatprep.subr.mxu0 0.0
    %516 = vmatpush2.msra.mxu0 0.0
    %517 = vmatprep.mubr.f32.mxu0 0.0
    %518 = vmatmul.mubr.f32.gmra.mxu0 %v448
    %v519 = vpop.f32.mrf.mxu0
    %v520 = vadd.f32 0.0, %v519
    %v521 = vpop.f32.mrf.mxu0
    %522 = vmatprep.mubr.f32.mxu0 0.0
    %523 = vmatmul.mubr.f32.gmra.mxu0 %v451
    %v524 = vpop.f32.mrf.mxu0
    %v525 = vadd.f32 0.0, %v524
    %v526 = vpop.f32.mrf.mxu0
    %527 = vdwg.mxu0
    %s528 = scalar_lea.vmem %s2, 128
    %v529 = vld [vmem:[%s528] sm:$0xff]
    %v530 = vld [vmem:[%s528 + $0x8] sm:$0xff]
    %v531 = vld [vmem:[%s528 + $0x10] sm:$0xff]
    %v532 = vld [vmem:[%s528 + $0x18] sm:$0xff]
    %v533 = vld [vmem:[%s528 + $0x20] sm:$0xff]
    %v534 = vld [vmem:[%s528 + $0x28] sm:$0xff]
    %v535 = vld [vmem:[%s528 + $0x30] sm:$0xff]
    %v536 = vld [vmem:[%s528 + $0x38] sm:$0xff]
    %v538 = vsel %vm281, %v520, 0
    %v541 = vsel %vm281, %v525, 0
    %543 = vmatprep.subr.mxu0 0.0
    %544 = vmatpush1.msra.mxu0 0.0
    %545 = vmatprep.subr.mxu0 0.0
    %546 = vmatpush1.msra.mxu0 0.0
    %547 = vmatprep.subr.mxu0 0.0
    %548 = vmatpush1.msra.mxu0 0.0
    %549 = vmatprep.subr.mxu0 0.0
    %550 = vmatpush1.msra.mxu0 0.0
    %551 = vmatprep.subr.mxu0 0.0
    %552 = vmatpush1.msra.mxu0 0.0
    %553 = vmatprep.subr.mxu0 0.0
    %554 = vmatpush1.msra.mxu0 0.0
    %555 = vmatprep.subr.mxu0 0.0
    %556 = vmatpush1.msra.mxu0 0.0
    %557 = vmatprep.subr.mxu0 0.0
    %558 = vmatpush1.msra.mxu0 0.0
    %559 = vmatprep.subr.mxu0 0.0
    %560 = vmatpush1.msra.mxu0 %v536
    %561 = vmatprep.subr.mxu0 0.0
    %562 = vmatpush1.msra.mxu0 %v535
    %563 = vmatprep.subr.mxu0 0.0
    %564 = vmatpush1.msra.mxu0 %v534
    %565 = vmatprep.subr.mxu0 0.0
    %566 = vmatpush1.msra.mxu0 %v533
    %567 = vmatprep.subr.mxu0 0.0
    %568 = vmatpush1.msra.mxu0 %v532
    %569 = vmatprep.subr.mxu0 0.0
    %570 = vmatpush1.msra.mxu0 %v531
    %571 = vmatprep.subr.mxu0 0.0
    %572 = vmatpush1.msra.mxu0 %v530
    %573 = vmatprep.subr.mxu0 0.0
    %574 = vmatpush1.msra.mxu0 %v529
    %575 = vmatprep.subr.mxu0 0.0
    %576 = vmatpush2.msra.mxu0 0.0
    %577 = vmatprep.subr.mxu0 0.0
    %578 = vmatpush2.msra.mxu0 0.0
    %579 = vmatprep.subr.mxu0 0.0
    %580 = vmatpush2.msra.mxu0 0.0
    %581 = vmatprep.subr.mxu0 0.0
    %582 = vmatpush2.msra.mxu0 0.0
    %583 = vmatprep.subr.mxu0 0.0
    %584 = vmatpush2.msra.mxu0 0.0
    %585 = vmatprep.subr.mxu0 0.0
    %586 = vmatpush2.msra.mxu0 0.0
    %587 = vmatprep.subr.mxu0 0.0
    %588 = vmatpush2.msra.mxu0 0.0
    %589 = vmatprep.subr.mxu0 0.0
    %590 = vmatpush2.msra.mxu0 0.0
    %591 = vmatprep.subr.mxu0 0.0
    %592 = vmatpush2.msra.mxu0 0.0
    %593 = vmatprep.subr.mxu0 0.0
    %594 = vmatpush2.msra.mxu0 0.0
    %595 = vmatprep.subr.mxu0 0.0
    %596 = vmatpush2.msra.mxu0 0.0
    %597 = vmatprep.subr.mxu0 0.0
    %598 = vmatpush2.msra.mxu0 0.0
    %599 = vmatprep.subr.mxu0 0.0
    %600 = vmatpush2.msra.mxu0 0.0
    %601 = vmatprep.subr.mxu0 0.0
    %602 = vmatpush2.msra.mxu0 0.0
    %603 = vmatprep.subr.mxu0 0.0
    %604 = vmatpush2.msra.mxu0 0.0
    %605 = vmatprep.subr.mxu0 0.0
    %606 = vmatpush2.msra.mxu0 0.0
    %607 = vmatprep.mubr.f32.mxu0 0.0
    %608 = vmatmul.mubr.f32.gmra.mxu0 %v538
    %v609 = vpop.f32.mrf.mxu0
    %v610 = vadd.f32 0.0, %v609
    %v611 = vpop.f32.mrf.mxu0
    %612 = vmatprep.mubr.f32.mxu0 0.0
    %613 = vmatmul.mubr.f32.gmra.mxu0 %v541
    %v614 = vpop.f32.mrf.mxu0
    %v615 = vadd.f32 0.0, %v614
    %v616 = vpop.f32.mrf.mxu0
    %617 = vdwg.mxu0
    %v618 = vadd.f32 %v436, %v610
    %v619 = vadd.f32 %v441, %v615
    %s620 = scalar_lea.vmem [#allocation2], 48
    %v621 = vld [vmem:[%s620] sm:$0xff]
    %v622 = vld [vmem:[%s620 + $0x8] sm:$0xff]
    %v624 = vsel %vm98, %v621, 0
    %v627 = vsel %vm98, %v622, 0
    %629 = vmatprep.subr.mxu0 0.0
    %630 = vmatpush1.msra.mxu0 0.0
    %631 = vmatprep.subr.mxu0 0.0
    %632 = vmatpush1.msra.mxu0 0.0
    %633 = vmatprep.subr.mxu0 0.0
    %634 = vmatpush1.msra.mxu0 0.0
    %635 = vmatprep.subr.mxu0 0.0
    %636 = vmatpush1.msra.mxu0 0.0
    %637 = vmatprep.subr.mxu0 0.0
    %638 = vmatpush1.msra.mxu0 0.0
    %639 = vmatprep.subr.mxu0 0.0
    %640 = vmatpush1.msra.mxu0 0.0
    %641 = vmatprep.subr.mxu0 0.0
    %642 = vmatpush1.msra.mxu0 0.0
    %643 = vmatprep.subr.mxu0 0.0
    %644 = vmatpush1.msra.mxu0 0.0
    %645 = vmatprep.subr.mxu0 0.0
    %646 = vmatpush1.msra.mxu0 0.0
    %647 = vmatprep.subr.mxu0 0.0
    %648 = vmatpush1.msra.mxu0 0.0
    %649 = vmatprep.subr.mxu0 0.0
    %650 = vmatpush1.msra.mxu0 0.0
    %651 = vmatprep.subr.mxu0 0.0
    %652 = vmatpush1.msra.mxu0 0.0
    %653 = vmatprep.subr.mxu0 0.0
    %654 = vmatpush1.msra.mxu0 %v95
    %655 = vmatprep.subr.mxu0 0.0
    %656 = vmatpush1.msra.mxu0 %v94
    %657 = vmatprep.subr.mxu0 0.0
    %658 = vmatpush1.msra.mxu0 %v93
    %659 = vmatprep.subr.mxu0 0.0
    %660 = vmatpush1.msra.mxu0 %v92
    %661 = vmatprep.subr.mxu0 0.0
    %662 = vmatpush2.msra.mxu0 0.0
    %663 = vmatprep.subr.mxu0 0.0
    %664 = vmatpush2.msra.mxu0 0.0
    %665 = vmatprep.subr.mxu0 0.0
    %666 = vmatpush2.msra.mxu0 0.0
    %667 = vmatprep.subr.mxu0 0.0
    %668 = vmatpush2.msra.mxu0 0.0
    %669 = vmatprep.subr.mxu0 0.0
    %670 = vmatpush2.msra.mxu0 0.0
    %671 = vmatprep.subr.mxu0 0.0
    %672 = vmatpush2.msra.mxu0 0.0
    %673 = vmatprep.subr.mxu0 0.0
    %674 = vmatpush2.msra.mxu0 0.0
    %675 = vmatprep.subr.mxu0 0.0
    %676 = vmatpush2.msra.mxu0 0.0
    %677 = vmatprep.subr.mxu0 0.0
    %678 = vmatpush2.msra.mxu0 0.0
    %679 = vmatprep.subr.mxu0 0.0
    %680 = vmatpush2.msra.mxu0 0.0
    %681 = vmatprep.subr.mxu0 0.0
    %682 = vmatpush2.msra.mxu0 0.0
    %683 = vmatprep.subr.mxu0 0.0
    %684 = vmatpush2.msra.mxu0 0.0
    %685 = vmatprep.subr.mxu0 0.0
    %686 = vmatpush2.msra.mxu0 0.0
    %687 = vmatprep.subr.mxu0 0.0
    %688 = vmatpush2.msra.mxu0 0.0
    %689 = vmatprep.subr.mxu0 0.0
    %690 = vmatpush2.msra.mxu0 0.0
    %691 = vmatprep.subr.mxu0 0.0
    %692 = vmatpush2.msra.mxu0 0.0
    %693 = vmatprep.mubr.f32.mxu0 0.0
    %694 = vmatmul.mubr.f32.gmra.mxu0 %v624
    %v695 = vpop.f32.mrf.mxu0
    %v696 = vadd.f32 0.0, %v695
    %v697 = vpop.f32.mrf.mxu0
    %698 = vmatprep.mubr.f32.mxu0 0.0
    %699 = vmatmul.mubr.f32.gmra.mxu0 %v627
    %v700 = vpop.f32.mrf.mxu0
    %v701 = vadd.f32 0.0, %v700
    %v702 = vpop.f32.mrf.mxu0
    %703 = vdwg.mxu0
    %s704 = scalar_lea.vmem %s2, 192
    %v705 = vld [vmem:[%s704] sm:$0xff]
    %v706 = vld [vmem:[%s704 + $0x8] sm:$0xff]
    %v707 = vld [vmem:[%s704 + $0x10] sm:$0xff]
    %v708 = vld [vmem:[%s704 + $0x18] sm:$0xff]
    %v709 = vld [vmem:[%s704 + $0x20] sm:$0xff]
    %v710 = vld [vmem:[%s704 + $0x28] sm:$0xff]
    %v711 = vld [vmem:[%s704 + $0x30] sm:$0xff]
    %v712 = vld [vmem:[%s704 + $0x38] sm:$0xff]
    %v714 = vsel %vm281, %v696, 0
    %v717 = vsel %vm281, %v701, 0
    %719 = vmatprep.subr.mxu0 0.0
    %720 = vmatpush1.msra.mxu0 0.0
    %721 = vmatprep.subr.mxu0 0.0
    %722 = vmatpush1.msra.mxu0 0.0
    %723 = vmatprep.subr.mxu0 0.0
    %724 = vmatpush1.msra.mxu0 0.0
    %725 = vmatprep.subr.mxu0 0.0
    %726 = vmatpush1.msra.mxu0 0.0
    %727 = vmatprep.subr.mxu0 0.0
    %728 = vmatpush1.msra.mxu0 0.0
    %729 = vmatprep.subr.mxu0 0.0
    %730 = vmatpush1.msra.mxu0 0.0
    %731 = vmatprep.subr.mxu0 0.0
    %732 = vmatpush1.msra.mxu0 0.0
    %733 = vmatprep.subr.mxu0 0.0
    %734 = vmatpush1.msra.mxu0 0.0
    %735 = vmatprep.subr.mxu0 0.0
    %736 = vmatpush1.msra.mxu0 %v712
    %737 = vmatprep.subr.mxu0 0.0
    %738 = vmatpush1.msra.mxu0 %v711
    %739 = vmatprep.subr.mxu0 0.0
    %740 = vmatpush1.msra.mxu0 %v710
    %741 = vmatprep.subr.mxu0 0.0
    %742 = vmatpush1.msra.mxu0 %v709
    %743 = vmatprep.subr.mxu0 0.0
    %744 = vmatpush1.msra.mxu0 %v708
    %745 = vmatprep.subr.mxu0 0.0
    %746 = vmatpush1.msra.mxu0 %v707
    %747 = vmatprep.subr.mxu0 0.0
    %748 = vmatpush1.msra.mxu0 %v706
    %749 = vmatprep.subr.mxu0 0.0
    %750 = vmatpush1.msra.mxu0 %v705
    %751 = vmatprep.subr.mxu0 0.0
    %752 = vmatpush2.msra.mxu0 0.0
    %753 = vmatprep.subr.mxu0 0.0
    %754 = vmatpush2.msra.mxu0 0.0
    %755 = vmatprep.subr.mxu0 0.0
    %756 = vmatpush2.msra.mxu0 0.0
    %757 = vmatprep.subr.mxu0 0.0
    %758 = vmatpush2.msra.mxu0 0.0
    %759 = vmatprep.subr.mxu0 0.0
    %760 = vmatpush2.msra.mxu0 0.0
    %761 = vmatprep.subr.mxu0 0.0
    %762 = vmatpush2.msra.mxu0 0.0
    %763 = vmatprep.subr.mxu0 0.0
    %764 = vmatpush2.msra.mxu0 0.0
    %765 = vmatprep.subr.mxu0 0.0
    %766 = vmatpush2.msra.mxu0 0.0
    %767 = vmatprep.subr.mxu0 0.0
    %768 = vmatpush2.msra.mxu0 0.0
    %769 = vmatprep.subr.mxu0 0.0
    %770 = vmatpush2.msra.mxu0 0.0
    %771 = vmatprep.subr.mxu0 0.0
    %772 = vmatpush2.msra.mxu0 0.0
    %773 = vmatprep.subr.mxu0 0.0
    %774 = vmatpush2.msra.mxu0 0.0
    %775 = vmatprep.subr.mxu0 0.0
    %776 = vmatpush2.msra.mxu0 0.0
    %777 = vmatprep.subr.mxu0 0.0
    %778 = vmatpush2.msra.mxu0 0.0
    %779 = vmatprep.subr.mxu0 0.0
    %780 = vmatpush2.msra.mxu0 0.0
    %781 = vmatprep.subr.mxu0 0.0
    %782 = vmatpush2.msra.mxu0 0.0
    %783 = vmatprep.mubr.f32.mxu0 0.0
    %784 = vmatmul.mubr.f32.gmra.mxu0 %v714
    %v785 = vpop.f32.mrf.mxu0
    %v786 = vadd.f32 0.0, %v785
    %v787 = vpop.f32.mrf.mxu0
    %788 = vmatprep.mubr.f32.mxu0 0.0
    %789 = vmatmul.mubr.f32.gmra.mxu0 %v717
    %v790 = vpop.f32.mrf.mxu0
    %v791 = vadd.f32 0.0, %v790
    %v792 = vpop.f32.mrf.mxu0
    %793 = vdwg.mxu0
    %v794 = vadd.f32 %v618, %v786
    %v795 = vadd.f32 %v619, %v791
    %v796 = vld [vmem:[%s3] sm:$0x1]
    %v798 = vlaneseq
    %v799 = vshrl.u32 %v798, 7
    %v800 = vsub.s32 0, %v799
    %v801 = vrot.slane %v796, %v800
    %v803 = vadd.f32 %v794, %v801
    %v804 = vadd.f32 %v795, %v801
    %vm805 = vcmp.ge.f32.partialorder %v803, 0.0
    %vm806 = vcmp.ge.f32.partialorder %v804, 0.0
    %v807 = vmul.f32 %v803, 0.2
    %v808 = vmul.f32 %v804, 0.2
    %v809 = vsel %vm805, %v803, %v807
    %v810 = vsel %vm806, %v804, %v808
    %v811 = vld [vmem:[#allocation5] sm:$0xff]
    %vm812 = vcmask 130048
    %v814 = vsel %vm812, %v811, 0
    %816 = vmatprep.subr.mxu0 0.0
    %817 = vmatpush1.msra.mxu0 0.0
    %818 = vmatprep.subr.mxu0 0.0
    %819 = vmatpush1.msra.mxu0 0.0
    %820 = vmatprep.subr.mxu0 0.0
    %821 = vmatpush1.msra.mxu0 0.0
    %822 = vmatprep.subr.mxu0 0.0
    %823 = vmatpush1.msra.mxu0 0.0
    %824 = vmatprep.subr.mxu0 0.0
    %825 = vmatpush1.msra.mxu0 0.0
    %826 = vmatprep.subr.mxu0 0.0
    %827 = vmatpush1.msra.mxu0 0.0
    %828 = vmatprep.subr.mxu0 0.0
    %829 = vmatpush1.msra.mxu0 0.0
    %830 = vmatprep.subr.mxu0 0.0
    %831 = vmatpush1.msra.mxu0 0.0
    %832 = vmatprep.subr.mxu0 0.0
    %833 = vmatpush1.msra.mxu0 0.0
    %834 = vmatprep.subr.mxu0 0.0
    %835 = vmatpush1.msra.mxu0 0.0
    %836 = vmatprep.subr.mxu0 0.0
    %837 = vmatpush1.msra.mxu0 0.0
    %838 = vmatprep.subr.mxu0 0.0
    %839 = vmatpush1.msra.mxu0 0.0
    %840 = vmatprep.subr.mxu0 0.0
    %841 = vmatpush1.msra.mxu0 0.0
    %842 = vmatprep.subr.mxu0 0.0
    %843 = vmatpush1.msra.mxu0 0.0
    %844 = vmatprep.subr.mxu0 0.0
    %845 = vmatpush1.msra.mxu0 %v810
    %846 = vmatprep.subr.mxu0 0.0
    %847 = vmatpush1.msra.mxu0 %v809
    %848 = vmatprep.subr.mxu0 0.0
    %849 = vmatpush2.msra.mxu0 0.0
    %850 = vmatprep.subr.mxu0 0.0
    %851 = vmatpush2.msra.mxu0 0.0
    %852 = vmatprep.subr.mxu0 0.0
    %853 = vmatpush2.msra.mxu0 0.0
    %854 = vmatprep.subr.mxu0 0.0
    %855 = vmatpush2.msra.mxu0 0.0
    %856 = vmatprep.subr.mxu0 0.0
    %857 = vmatpush2.msra.mxu0 0.0
    %858 = vmatprep.subr.mxu0 0.0
    %859 = vmatpush2.msra.mxu0 0.0
    %860 = vmatprep.subr.mxu0 0.0
    %861 = vmatpush2.msra.mxu0 0.0
    %862 = vmatprep.subr.mxu0 0.0
    %863 = vmatpush2.msra.mxu0 0.0
    %864 = vmatprep.subr.mxu0 0.0
    %865 = vmatpush2.msra.mxu0 0.0
    %866 = vmatprep.subr.mxu0 0.0
    %867 = vmatpush2.msra.mxu0 0.0
    %868 = vmatprep.subr.mxu0 0.0
    %869 = vmatpush2.msra.mxu0 0.0
    %870 = vmatprep.subr.mxu0 0.0
    %871 = vmatpush2.msra.mxu0 0.0
    %872 = vmatprep.subr.mxu0 0.0
    %873 = vmatpush2.msra.mxu0 0.0
    %874 = vmatprep.subr.mxu0 0.0
    %875 = vmatpush2.msra.mxu0 0.0
    %876 = vmatprep.subr.mxu0 0.0
    %877 = vmatpush2.msra.mxu0 0.0
    %878 = vmatprep.subr.mxu0 0.0
    %879 = vmatpush2.msra.mxu0 0.0
    %880 = vmatprep.mubr.f32.mxu0 0.0
    %881 = vmatmul.mubr.f32.gmra.mxu0 %v814
    %v882 = vpop.f32.mrf.mxu0
    %v883 = vadd.f32 0.0, %v882
    %v884 = vpop.f32.mrf.mxu0
    %885 = vdwg.mxu0
    %v886 = vld [vmem:[%s5] sm:$0xff]
    %v887 = vld [vmem:[%s5 + $0x8] sm:$0xff]
    %v888 = vld [vmem:[%s5 + $0x10] sm:$0xff]
    %v889 = vld [vmem:[%s5 + $0x18] sm:$0xff]
    %v890 = vld [vmem:[%s5 + $0x20] sm:$0xff]
    %v891 = vld [vmem:[%s5 + $0x28] sm:$0xff]
    %v892 = vld [vmem:[%s5 + $0x30] sm:$0xff]
    %v893 = vld [vmem:[%s5 + $0x38] sm:$0xff]
    %s894 = scalar_lea.vmem [#allocation5], 8
    %v895 = vld [vmem:[%s894] sm:$0xff]
    %v897 = vsel %vm812, %v895, 0
    %899 = vmatprep.subr.mxu0 0.0
    %900 = vmatpush1.msra.mxu0 0.0
    %901 = vmatprep.subr.mxu0 0.0
    %902 = vmatpush1.msra.mxu0 0.0
    %903 = vmatprep.subr.mxu0 0.0
    %904 = vmatpush1.msra.mxu0 0.0
    %905 = vmatprep.subr.mxu0 0.0
    %906 = vmatpush1.msra.mxu0 0.0
    %907 = vmatprep.subr.mxu0 0.0
    %908 = vmatpush1.msra.mxu0 0.0
    %909 = vmatprep.subr.mxu0 0.0
    %910 = vmatpush1.msra.mxu0 0.0
    %911 = vmatprep.subr.mxu0 0.0
    %912 = vmatpush1.msra.mxu0 0.0
    %913 = vmatprep.subr.mxu0 0.0
    %914 = vmatpush1.msra.mxu0 0.0
    %915 = vmatprep.subr.mxu0 0.0
    %916 = vmatpush1.msra.mxu0 0.0
    %917 = vmatprep.subr.mxu0 0.0
    %918 = vmatpush1.msra.mxu0 0.0
    %919 = vmatprep.subr.mxu0 0.0
    %920 = vmatpush1.msra.mxu0 0.0
    %921 = vmatprep.subr.mxu0 0.0
    %922 = vmatpush1.msra.mxu0 0.0
    %923 = vmatprep.subr.mxu0 0.0
    %924 = vmatpush1.msra.mxu0 0.0
    %925 = vmatprep.subr.mxu0 0.0
    %926 = vmatpush1.msra.mxu0 0.0
    %927 = vmatprep.subr.mxu0 0.0
    %928 = vmatpush1.msra.mxu0 %v810
    %929 = vmatprep.subr.mxu0 0.0
    %930 = vmatpush1.msra.mxu0 %v809
    %931 = vmatprep.subr.mxu0 0.0
    %932 = vmatpush2.msra.mxu0 0.0
    %933 = vmatprep.subr.mxu0 0.0
    %934 = vmatpush2.msra.mxu0 0.0
    %935 = vmatprep.subr.mxu0 0.0
    %936 = vmatpush2.msra.mxu0 0.0
    %937 = vmatprep.subr.mxu0 0.0
    %938 = vmatpush2.msra.mxu0 0.0
    %939 = vmatprep.subr.mxu0 0.0
    %940 = vmatpush2.msra.mxu0 0.0
    %941 = vmatprep.subr.mxu0 0.0
    %942 = vmatpush2.msra.mxu0 0.0
    %943 = vmatprep.subr.mxu0 0.0
    %944 = vmatpush2.msra.mxu0 0.0
    %945 = vmatprep.subr.mxu0 0.0
    %946 = vmatpush2.msra.mxu0 0.0
    %947 = vmatprep.subr.mxu0 0.0
    %948 = vmatpush2.msra.mxu0 0.0
    %949 = vmatprep.subr.mxu0 0.0
    %950 = vmatpush2.msra.mxu0 0.0
    %951 = vmatprep.subr.mxu0 0.0
    %952 = vmatpush2.msra.mxu0 0.0
    %953 = vmatprep.subr.mxu0 0.0
    %954 = vmatpush2.msra.mxu0 0.0
    %955 = vmatprep.subr.mxu0 0.0
    %956 = vmatpush2.msra.mxu0 0.0
    %957 = vmatprep.subr.mxu0 0.0
    %958 = vmatpush2.msra.mxu0 0.0
    %959 = vmatprep.subr.mxu0 0.0
    %960 = vmatpush2.msra.mxu0 0.0
    %961 = vmatprep.subr.mxu0 0.0
    %962 = vmatpush2.msra.mxu0 0.0
    %963 = vmatprep.mubr.f32.mxu0 0.0
    %964 = vmatmul.mubr.f32.gmra.mxu0 %v897
    %v965 = vpop.f32.mrf.mxu0
    %v966 = vadd.f32 0.0, %v965
    %v967 = vpop.f32.mrf.mxu0
    %968 = vdwg.mxu0
    %s969 = scalar_lea.vmem %s5, 64
    %v970 = vld [vmem:[%s969] sm:$0xff]
    %v971 = vld [vmem:[%s969 + $0x8] sm:$0xff]
    %v972 = vld [vmem:[%s969 + $0x10] sm:$0xff]
    %v973 = vld [vmem:[%s969 + $0x18] sm:$0xff]
    %v974 = vld [vmem:[%s969 + $0x20] sm:$0xff]
    %v975 = vld [vmem:[%s969 + $0x28] sm:$0xff]
    %v976 = vld [vmem:[%s969 + $0x30] sm:$0xff]
    %v977 = vld [vmem:[%s969 + $0x38] sm:$0xff]
    %v979 = vsel %vm281, %v966, 0
    %981 = vmatprep.subr.mxu0 0.0
    %982 = vmatpush1.msra.mxu0 0.0
    %983 = vmatprep.subr.mxu0 0.0
    %984 = vmatpush1.msra.mxu0 0.0
    %985 = vmatprep.subr.mxu0 0.0
    %986 = vmatpush1.msra.mxu0 0.0
    %987 = vmatprep.subr.mxu0 0.0
    %988 = vmatpush1.msra.mxu0 0.0
    %989 = vmatprep.subr.mxu0 0.0
    %990 = vmatpush1.msra.mxu0 0.0
    %991 = vmatprep.subr.mxu0 0.0
    %992 = vmatpush1.msra.mxu0 0.0
    %993 = vmatprep.subr.mxu0 0.0
    %994 = vmatpush1.msra.mxu0 0.0
    %995 = vmatprep.subr.mxu0 0.0
    %996 = vmatpush1.msra.mxu0 0.0
    %997 = vmatprep.subr.mxu0 0.0
    %998 = vmatpush1.msra.mxu0 %v977
    %999 = vmatprep.subr.mxu0 0.0
    %1000 = vmatpush1.msra.mxu0 %v976
    %1001 = vmatprep.subr.mxu0 0.0
    %1002 = vmatpush1.msra.mxu0 %v975
    %1003 = vmatprep.subr.mxu0 0.0
    %1004 = vmatpush1.msra.mxu0 %v974
    %1005 = vmatprep.subr.mxu0 0.0
    %1006 = vmatpush1.msra.mxu0 %v973
    %1007 = vmatprep.subr.mxu0 0.0
    %1008 = vmatpush1.msra.mxu0 %v972
    %1009 = vmatprep.subr.mxu0 0.0
    %1010 = vmatpush1.msra.mxu0 %v971
    %1011 = vmatprep.subr.mxu0 0.0
    %1012 = vmatpush1.msra.mxu0 %v970
    %1013 = vmatprep.subr.mxu0 0.0
    %1014 = vmatpush2.msra.mxu0 0.0
    %1015 = vmatprep.subr.mxu0 0.0
    %1016 = vmatpush2.msra.mxu0 0.0
    %1017 = vmatprep.subr.mxu0 0.0
    %1018 = vmatpush2.msra.mxu0 0.0
    %1019 = vmatprep.subr.mxu0 0.0
    %1020 = vmatpush2.msra.mxu0 0.0
    %1021 = vmatprep.subr.mxu0 0.0
    %1022 = vmatpush2.msra.mxu0 0.0
    %1023 = vmatprep.subr.mxu0 0.0
    %1024 = vmatpush2.msra.mxu0 0.0
    %1025 = vmatprep.subr.mxu0 0.0
    %1026 = vmatpush2.msra.mxu0 0.0
    %1027 = vmatprep.subr.mxu0 0.0
    %1028 = vmatpush2.msra.mxu0 0.0
    %1029 = vmatprep.subr.mxu0 0.0
    %1030 = vmatpush2.msra.mxu0 0.0
    %1031 = vmatprep.subr.mxu0 0.0
    %1032 = vmatpush2.msra.mxu0 0.0
    %1033 = vmatprep.subr.mxu0 0.0
    %1034 = vmatpush2.msra.mxu0 0.0
    %1035 = vmatprep.subr.mxu0 0.0
    %1036 = vmatpush2.msra.mxu0 0.0
    %1037 = vmatprep.subr.mxu0 0.0
    %1038 = vmatpush2.msra.mxu0 0.0
    %1039 = vmatprep.subr.mxu0 0.0
    %1040 = vmatpush2.msra.mxu0 0.0
    %1041 = vmatprep.subr.mxu0 0.0
    %1042 = vmatpush2.msra.mxu0 0.0
    %1043 = vmatprep.subr.mxu0 0.0
    %1044 = vmatpush2.msra.mxu0 0.0
    %1045 = vmatprep.mubr.f32.mxu0 0.0
    %1046 = vmatmul.mubr.f32.gmra.mxu0 %v979
    %v1047 = vpop.f32.mrf.mxu0
    %v1048 = vadd.f32 0.0, %v1047
    %v1049 = vpop.f32.mrf.mxu0
    %1050 = vdwg.mxu0
    %v1052 = vsel %vm281, %v883, 0
    %1054 = vmatprep.subr.mxu0 0.0
    %1055 = vmatpush1.msra.mxu0 0.0
    %1056 = vmatprep.subr.mxu0 0.0
    %1057 = vmatpush1.msra.mxu0 0.0
    %1058 = vmatprep.subr.mxu0 0.0
    %1059 = vmatpush1.msra.mxu0 0.0
    %1060 = vmatprep.subr.mxu0 0.0
    %1061 = vmatpush1.msra.mxu0 0.0
    %1062 = vmatprep.subr.mxu0 0.0
    %1063 = vmatpush1.msra.mxu0 0.0
    %1064 = vmatprep.subr.mxu0 0.0
    %1065 = vmatpush1.msra.mxu0 0.0
    %1066 = vmatprep.subr.mxu0 0.0
    %1067 = vmatpush1.msra.mxu0 0.0
    %1068 = vmatprep.subr.mxu0 0.0
    %1069 = vmatpush1.msra.mxu0 0.0
    %1070 = vmatprep.subr.mxu0 0.0
    %1071 = vmatpush1.msra.mxu0 %v893
    %1072 = vmatprep.subr.mxu0 0.0
    %1073 = vmatpush1.msra.mxu0 %v892
    %1074 = vmatprep.subr.mxu0 0.0
    %1075 = vmatpush1.msra.mxu0 %v891
    %1076 = vmatprep.subr.mxu0 0.0
    %1077 = vmatpush1.msra.mxu0 %v890
    %1078 = vmatprep.subr.mxu0 0.0
    %1079 = vmatpush1.msra.mxu0 %v889
    %1080 = vmatprep.subr.mxu0 0.0
    %1081 = vmatpush1.msra.mxu0 %v888
    %1082 = vmatprep.subr.mxu0 0.0
    %1083 = vmatpush1.msra.mxu0 %v887
    %1084 = vmatprep.subr.mxu0 0.0
    %1085 = vmatpush1.msra.mxu0 %v886
    %1086 = vmatprep.subr.mxu0 0.0
    %1087 = vmatpush2.msra.mxu0 0.0
    %1088 = vmatprep.subr.mxu0 0.0
    %1089 = vmatpush2.msra.mxu0 0.0
    %1090 = vmatprep.subr.mxu0 0.0
    %1091 = vmatpush2.msra.mxu0 0.0
    %1092 = vmatprep.subr.mxu0 0.0
    %1093 = vmatpush2.msra.mxu0 0.0
    %1094 = vmatprep.subr.mxu0 0.0
    %1095 = vmatpush2.msra.mxu0 0.0
    %1096 = vmatprep.subr.mxu0 0.0
    %1097 = vmatpush2.msra.mxu0 0.0
    %1098 = vmatprep.subr.mxu0 0.0
    %1099 = vmatpush2.msra.mxu0 0.0
    %1100 = vmatprep.subr.mxu0 0.0
    %1101 = vmatpush2.msra.mxu0 0.0
    %1102 = vmatprep.subr.mxu0 0.0
    %1103 = vmatpush2.msra.mxu0 0.0
    %1104 = vmatprep.subr.mxu0 0.0
    %1105 = vmatpush2.msra.mxu0 0.0
    %1106 = vmatprep.subr.mxu0 0.0
    %1107 = vmatpush2.msra.mxu0 0.0
    %1108 = vmatprep.subr.mxu0 0.0
    %1109 = vmatpush2.msra.mxu0 0.0
    %1110 = vmatprep.subr.mxu0 0.0
    %1111 = vmatpush2.msra.mxu0 0.0
    %1112 = vmatprep.subr.mxu0 0.0
    %1113 = vmatpush2.msra.mxu0 0.0
    %1114 = vmatprep.subr.mxu0 0.0
    %1115 = vmatpush2.msra.mxu0 0.0
    %1116 = vmatprep.subr.mxu0 0.0
    %1117 = vmatpush2.msra.mxu0 0.0
    %1118 = vmatprep.mubr.f32.mxu0 0.0
    %1119 = vmatmul.mubr.f32.gmra.mxu0 %v1052
    %v1120 = vpop.f32.mrf.mxu0
    %v1121 = vadd.f32 %v1048, %v1120
    %v1122 = vpop.f32.mrf.mxu0
    %1123 = vdwg.mxu0
    %s1124 = scalar_lea.vmem [#allocation5], 16
    %v1125 = vld [vmem:[%s1124] sm:$0xff]
    %v1127 = vsel %vm812, %v1125, 0
    %1129 = vmatprep.subr.mxu0 0.0
    %1130 = vmatpush1.msra.mxu0 0.0
    %1131 = vmatprep.subr.mxu0 0.0
    %1132 = vmatpush1.msra.mxu0 0.0
    %1133 = vmatprep.subr.mxu0 0.0
    %1134 = vmatpush1.msra.mxu0 0.0
    %1135 = vmatprep.subr.mxu0 0.0
    %1136 = vmatpush1.msra.mxu0 0.0
    %1137 = vmatprep.subr.mxu0 0.0
    %1138 = vmatpush1.msra.mxu0 0.0
    %1139 = vmatprep.subr.mxu0 0.0
    %1140 = vmatpush1.msra.mxu0 0.0
    %1141 = vmatprep.subr.mxu0 0.0
    %1142 = vmatpush1.msra.mxu0 0.0
    %1143 = vmatprep.subr.mxu0 0.0
    %1144 = vmatpush1.msra.mxu0 0.0
    %1145 = vmatprep.subr.mxu0 0.0
    %1146 = vmatpush1.msra.mxu0 0.0
    %1147 = vmatprep.subr.mxu0 0.0
    %1148 = vmatpush1.msra.mxu0 0.0
    %1149 = vmatprep.subr.mxu0 0.0
    %1150 = vmatpush1.msra.mxu0 0.0
    %1151 = vmatprep.subr.mxu0 0.0
    %1152 = vmatpush1.msra.mxu0 0.0
    %1153 = vmatprep.subr.mxu0 0.0
    %1154 = vmatpush1.msra.mxu0 0.0
    %1155 = vmatprep.subr.mxu0 0.0
    %1156 = vmatpush1.msra.mxu0 0.0
    %1157 = vmatprep.subr.mxu0 0.0
    %1158 = vmatpush1.msra.mxu0 %v810
    %1159 = vmatprep.subr.mxu0 0.0
    %1160 = vmatpush1.msra.mxu0 %v809
    %1161 = vmatprep.subr.mxu0 0.0
    %1162 = vmatpush2.msra.mxu0 0.0
    %1163 = vmatprep.subr.mxu0 0.0
    %1164 = vmatpush2.msra.mxu0 0.0
    %1165 = vmatprep.subr.mxu0 0.0
    %1166 = vmatpush2.msra.mxu0 0.0
    %1167 = vmatprep.subr.mxu0 0.0
    %1168 = vmatpush2.msra.mxu0 0.0
    %1169 = vmatprep.subr.mxu0 0.0
    %1170 = vmatpush2.msra.mxu0 0.0
    %1171 = vmatprep.subr.mxu0 0.0
    %1172 = vmatpush2.msra.mxu0 0.0
    %1173 = vmatprep.subr.mxu0 0.0
    %1174 = vmatpush2.msra.mxu0 0.0
    %1175 = vmatprep.subr.mxu0 0.0
    %1176 = vmatpush2.msra.mxu0 0.0
    %1177 = vmatprep.subr.mxu0 0.0
    %1178 = vmatpush2.msra.mxu0 0.0
    %1179 = vmatprep.subr.mxu0 0.0
    %1180 = vmatpush2.msra.mxu0 0.0
    %1181 = vmatprep.subr.mxu0 0.0
    %1182 = vmatpush2.msra.mxu0 0.0
    %1183 = vmatprep.subr.mxu0 0.0
    %1184 = vmatpush2.msra.mxu0 0.0
    %1185 = vmatprep.subr.mxu0 0.0
    %1186 = vmatpush2.msra.mxu0 0.0
    %1187 = vmatprep.subr.mxu0 0.0
    %1188 = vmatpush2.msra.mxu0 0.0
    %1189 = vmatprep.subr.mxu0 0.0
    %1190 = vmatpush2.msra.mxu0 0.0
    %1191 = vmatprep.subr.mxu0 0.0
    %1192 = vmatpush2.msra.mxu0 0.0
    %1193 = vmatprep.mubr.f32.mxu0 0.0
    %1194 = vmatmul.mubr.f32.gmra.mxu0 %v1127
    %v1195 = vpop.f32.mrf.mxu0
    %v1196 = vadd.f32 0.0, %v1195
    %v1197 = vpop.f32.mrf.mxu0
    %1198 = vdwg.mxu0
    %s1199 = scalar_lea.vmem %s5, 128
    %v1200 = vld [vmem:[%s1199] sm:$0xff]
    %v1201 = vld [vmem:[%s1199 + $0x8] sm:$0xff]
    %v1202 = vld [vmem:[%s1199 + $0x10] sm:$0xff]
    %v1203 = vld [vmem:[%s1199 + $0x18] sm:$0xff]
    %v1204 = vld [vmem:[%s1199 + $0x20] sm:$0xff]
    %v1205 = vld [vmem:[%s1199 + $0x28] sm:$0xff]
    %v1206 = vld [vmem:[%s1199 + $0x30] sm:$0xff]
    %v1207 = vld [vmem:[%s1199 + $0x38] sm:$0xff]
    %v1209 = vsel %vm281, %v1196, 0
    %1211 = vmatprep.subr.mxu0 0.0
    %1212 = vmatpush1.msra.mxu0 0.0
    %1213 = vmatprep.subr.mxu0 0.0
    %1214 = vmatpush1.msra.mxu0 0.0
    %1215 = vmatprep.subr.mxu0 0.0
    %1216 = vmatpush1.msra.mxu0 0.0
    %1217 = vmatprep.subr.mxu0 0.0
    %1218 = vmatpush1.msra.mxu0 0.0
    %1219 = vmatprep.subr.mxu0 0.0
    %1220 = vmatpush1.msra.mxu0 0.0
    %1221 = vmatprep.subr.mxu0 0.0
    %1222 = vmatpush1.msra.mxu0 0.0
    %1223 = vmatprep.subr.mxu0 0.0
    %1224 = vmatpush1.msra.mxu0 0.0
    %1225 = vmatprep.subr.mxu0 0.0
    %1226 = vmatpush1.msra.mxu0 0.0
    %1227 = vmatprep.subr.mxu0 0.0
    %1228 = vmatpush1.msra.mxu0 %v1207
    %1229 = vmatprep.subr.mxu0 0.0
    %1230 = vmatpush1.msra.mxu0 %v1206
    %1231 = vmatprep.subr.mxu0 0.0
    %1232 = vmatpush1.msra.mxu0 %v1205
    %1233 = vmatprep.subr.mxu0 0.0
    %1234 = vmatpush1.msra.mxu0 %v1204
    %1235 = vmatprep.subr.mxu0 0.0
    %1236 = vmatpush1.msra.mxu0 %v1203
    %1237 = vmatprep.subr.mxu0 0.0
    %1238 = vmatpush1.msra.mxu0 %v1202
    %1239 = vmatprep.subr.mxu0 0.0
    %1240 = vmatpush1.msra.mxu0 %v1201
    %1241 = vmatprep.subr.mxu0 0.0
    %1242 = vmatpush1.msra.mxu0 %v1200
    %1243 = vmatprep.subr.mxu0 0.0
    %1244 = vmatpush2.msra.mxu0 0.0
    %1245 = vmatprep.subr.mxu0 0.0
    %1246 = vmatpush2.msra.mxu0 0.0
    %1247 = vmatprep.subr.mxu0 0.0
    %1248 = vmatpush2.msra.mxu0 0.0
    %1249 = vmatprep.subr.mxu0 0.0
    %1250 = vmatpush2.msra.mxu0 0.0
    %1251 = vmatprep.subr.mxu0 0.0
    %1252 = vmatpush2.msra.mxu0 0.0
    %1253 = vmatprep.subr.mxu0 0.0
    %1254 = vmatpush2.msra.mxu0 0.0
    %1255 = vmatprep.subr.mxu0 0.0
    %1256 = vmatpush2.msra.mxu0 0.0
    %1257 = vmatprep.subr.mxu0 0.0
    %1258 = vmatpush2.msra.mxu0 0.0
    %1259 = vmatprep.subr.mxu0 0.0
    %1260 = vmatpush2.msra.mxu0 0.0
    %1261 = vmatprep.subr.mxu0 0.0
    %1262 = vmatpush2.msra.mxu0 0.0
    %1263 = vmatprep.subr.mxu0 0.0
    %1264 = vmatpush2.msra.mxu0 0.0
    %1265 = vmatprep.subr.mxu0 0.0
    %1266 = vmatpush2.msra.mxu0 0.0
    %1267 = vmatprep.subr.mxu0 0.0
    %1268 = vmatpush2.msra.mxu0 0.0
    %1269 = vmatprep.subr.mxu0 0.0
    %1270 = vmatpush2.msra.mxu0 0.0
    %1271 = vmatprep.subr.mxu0 0.0
    %1272 = vmatpush2.msra.mxu0 0.0
    %1273 = vmatprep.subr.mxu0 0.0
    %1274 = vmatpush2.msra.mxu0 0.0
    %1275 = vmatprep.mubr.f32.mxu0 0.0
    %1276 = vmatmul.mubr.f32.gmra.mxu0 %v1209
    %v1277 = vpop.f32.mrf.mxu0
    %v1278 = vadd.f32 0.0, %v1277
    %v1279 = vpop.f32.mrf.mxu0
    %1280 = vdwg.mxu0
    %v1281 = vadd.f32 %v1121, %v1278
    %s1282 = scalar_lea.vmem [#allocation5], 24
    %v1283 = vld [vmem:[%s1282] sm:$0xff]
    %v1285 = vsel %vm812, %v1283, 0
    %1287 = vmatprep.subr.mxu0 0.0
    %1288 = vmatpush1.msra.mxu0 0.0
    %1289 = vmatprep.subr.mxu0 0.0
    %1290 = vmatpush1.msra.mxu0 0.0
    %1291 = vmatprep.subr.mxu0 0.0
    %1292 = vmatpush1.msra.mxu0 0.0
    %1293 = vmatprep.subr.mxu0 0.0
    %1294 = vmatpush1.msra.mxu0 0.0
    %1295 = vmatprep.subr.mxu0 0.0
    %1296 = vmatpush1.msra.mxu0 0.0
    %1297 = vmatprep.subr.mxu0 0.0
    %1298 = vmatpush1.msra.mxu0 0.0
    %1299 = vmatprep.subr.mxu0 0.0
    %1300 = vmatpush1.msra.mxu0 0.0
    %1301 = vmatprep.subr.mxu0 0.0
    %1302 = vmatpush1.msra.mxu0 0.0
    %1303 = vmatprep.subr.mxu0 0.0
    %1304 = vmatpush1.msra.mxu0 0.0
    %1305 = vmatprep.subr.mxu0 0.0
    %1306 = vmatpush1.msra.mxu0 0.0
    %1307 = vmatprep.subr.mxu0 0.0
    %1308 = vmatpush1.msra.mxu0 0.0
    %1309 = vmatprep.subr.mxu0 0.0
    %1310 = vmatpush1.msra.mxu0 0.0
    %1311 = vmatprep.subr.mxu0 0.0
    %1312 = vmatpush1.msra.mxu0 0.0
    %1313 = vmatprep.subr.mxu0 0.0
    %1314 = vmatpush1.msra.mxu0 0.0
    %1315 = vmatprep.subr.mxu0 0.0
    %1316 = vmatpush1.msra.mxu0 %v810
    %1317 = vmatprep.subr.mxu0 0.0
    %1318 = vmatpush1.msra.mxu0 %v809
    %1319 = vmatprep.subr.mxu0 0.0
    %1320 = vmatpush2.msra.mxu0 0.0
    %1321 = vmatprep.subr.mxu0 0.0
    %1322 = vmatpush2.msra.mxu0 0.0
    %1323 = vmatprep.subr.mxu0 0.0
    %1324 = vmatpush2.msra.mxu0 0.0
    %1325 = vmatprep.subr.mxu0 0.0
    %1326 = vmatpush2.msra.mxu0 0.0
    %1327 = vmatprep.subr.mxu0 0.0
    %1328 = vmatpush2.msra.mxu0 0.0
    %1329 = vmatprep.subr.mxu0 0.0
    %1330 = vmatpush2.msra.mxu0 0.0
    %1331 = vmatprep.subr.mxu0 0.0
    %1332 = vmatpush2.msra.mxu0 0.0
    %1333 = vmatprep.subr.mxu0 0.0
    %1334 = vmatpush2.msra.mxu0 0.0
    %1335 = vmatprep.subr.mxu0 0.0
    %1336 = vmatpush2.msra.mxu0 0.0
    %1337 = vmatprep.subr.mxu0 0.0
    %1338 = vmatpush2.msra.mxu0 0.0
    %1339 = vmatprep.subr.mxu0 0.0
    %1340 = vmatpush2.msra.mxu0 0.0
    %1341 = vmatprep.subr.mxu0 0.0
    %1342 = vmatpush2.msra.mxu0 0.0
    %1343 = vmatprep.subr.mxu0 0.0
    %1344 = vmatpush2.msra.mxu0 0.0
    %1345 = vmatprep.subr.mxu0 0.0
    %1346 = vmatpush2.msra.mxu0 0.0
    %1347 = vmatprep.subr.mxu0 0.0
    %1348 = vmatpush2.msra.mxu0 0.0
    %1349 = vmatprep.subr.mxu0 0.0
    %1350 = vmatpush2.msra.mxu0 0.0
    %1351 = vmatprep.mubr.f32.mxu0 0.0
    %1352 = vmatmul.mubr.f32.gmra.mxu0 %v1285
    %v1353 = vpop.f32.mrf.mxu0
    %v1354 = vadd.f32 0.0, %v1353
    %v1355 = vpop.f32.mrf.mxu0
    %1356 = vdwg.mxu0
    %s1357 = scalar_lea.vmem %s5, 192
    %v1358 = vld [vmem:[%s1357] sm:$0xff]
    %v1359 = vld [vmem:[%s1357 + $0x8] sm:$0xff]
    %v1360 = vld [vmem:[%s1357 + $0x10] sm:$0xff]
    %v1361 = vld [vmem:[%s1357 + $0x18] sm:$0xff]
    %v1362 = vld [vmem:[%s1357 + $0x20] sm:$0xff]
    %v1363 = vld [vmem:[%s1357 + $0x28] sm:$0xff]
    %v1364 = vld [vmem:[%s1357 + $0x30] sm:$0xff]
    %v1365 = vld [vmem:[%s1357 + $0x38] sm:$0xff]
    %v1367 = vsel %vm281, %v1354, 0
    %1369 = vmatprep.subr.mxu0 0.0
    %1370 = vmatpush1.msra.mxu0 0.0
    %1371 = vmatprep.subr.mxu0 0.0
    %1372 = vmatpush1.msra.mxu0 0.0
    %1373 = vmatprep.subr.mxu0 0.0
    %1374 = vmatpush1.msra.mxu0 0.0
    %1375 = vmatprep.subr.mxu0 0.0
    %1376 = vmatpush1.msra.mxu0 0.0
    %1377 = vmatprep.subr.mxu0 0.0
    %1378 = vmatpush1.msra.mxu0 0.0
    %1379 = vmatprep.subr.mxu0 0.0
    %1380 = vmatpush1.msra.mxu0 0.0
    %1381 = vmatprep.subr.mxu0 0.0
    %1382 = vmatpush1.msra.mxu0 0.0
    %1383 = vmatprep.subr.mxu0 0.0
    %1384 = vmatpush1.msra.mxu0 0.0
    %1385 = vmatprep.subr.mxu0 0.0
    %1386 = vmatpush1.msra.mxu0 %v1365
    %1387 = vmatprep.subr.mxu0 0.0
    %1388 = vmatpush1.msra.mxu0 %v1364
    %1389 = vmatprep.subr.mxu0 0.0
    %1390 = vmatpush1.msra.mxu0 %v1363
    %1391 = vmatprep.subr.mxu0 0.0
    %1392 = vmatpush1.msra.mxu0 %v1362
    %1393 = vmatprep.subr.mxu0 0.0
    %1394 = vmatpush1.msra.mxu0 %v1361
    %1395 = vmatprep.subr.mxu0 0.0
    %1396 = vmatpush1.msra.mxu0 %v1360
    %1397 = vmatprep.subr.mxu0 0.0
    %1398 = vmatpush1.msra.mxu0 %v1359
    %1399 = vmatprep.subr.mxu0 0.0
    %1400 = vmatpush1.msra.mxu0 %v1358
    %1401 = vmatprep.subr.mxu0 0.0
    %1402 = vmatpush2.msra.mxu0 0.0
    %1403 = vmatprep.subr.mxu0 0.0
    %1404 = vmatpush2.msra.mxu0 0.0
    %1405 = vmatprep.subr.mxu0 0.0
    %1406 = vmatpush2.msra.mxu0 0.0
    %1407 = vmatprep.subr.mxu0 0.0
    %1408 = vmatpush2.msra.mxu0 0.0
    %1409 = vmatprep.subr.mxu0 0.0
    %1410 = vmatpush2.msra.mxu0 0.0
    %1411 = vmatprep.subr.mxu0 0.0
    %1412 = vmatpush2.msra.mxu0 0.0
    %1413 = vmatprep.subr.mxu0 0.0
    %1414 = vmatpush2.msra.mxu0 0.0
    %1415 = vmatprep.subr.mxu0 0.0
    %1416 = vmatpush2.msra.mxu0 0.0
    %1417 = vmatprep.subr.mxu0 0.0
    %1418 = vmatpush2.msra.mxu0 0.0
    %1419 = vmatprep.subr.mxu0 0.0
    %1420 = vmatpush2.msra.mxu0 0.0
    %1421 = vmatprep.subr.mxu0 0.0
    %1422 = vmatpush2.msra.mxu0 0.0
    %1423 = vmatprep.subr.mxu0 0.0
    %1424 = vmatpush2.msra.mxu0 0.0
    %1425 = vmatprep.subr.mxu0 0.0
    %1426 = vmatpush2.msra.mxu0 0.0
    %1427 = vmatprep.subr.mxu0 0.0
    %1428 = vmatpush2.msra.mxu0 0.0
    %1429 = vmatprep.subr.mxu0 0.0
    %1430 = vmatpush2.msra.mxu0 0.0
    %1431 = vmatprep.subr.mxu0 0.0
    %1432 = vmatpush2.msra.mxu0 0.0
    %1433 = vmatprep.mubr.f32.mxu0 0.0
    %1434 = vmatmul.mubr.f32.gmra.mxu0 %v1367
    %v1435 = vpop.f32.mrf.mxu0
    %v1436 = vadd.f32 0.0, %v1435
    %v1437 = vpop.f32.mrf.mxu0
    %1438 = vdwg.mxu0
    %v1439 = vadd.f32 %v1281, %v1436
    %v1440 = vld [vmem:[%s6] sm:$0x1]
    %v1442 = vlaneseq
    %v1443 = vshrl.u32 %v1442, 7
    %v1444 = vsub.s32 0, %v1443
    %v1445 = vrot.slane %v1440, %v1444
    %v1447 = vadd.f32 %v1439, %v1445
    %vm1448 = vcmp.ge.f32.partialorder %v1447, 0.0
    %v1449 = vmul.f32 %v1447, 0.2
    %v1450 = vsel %vm1448, %v1447, %v1449
    %v1451 = vld [vmem:[#allocation7] sm:$0xf]
    %vm1452 = vcmask 64512
    %v1454 = vsel %vm1452, %v1451, 0
    %1456 = vmatprep.subr.mxu0 0.0
    %1457 = vmatpush1.msra.mxu0 0.0
    %1458 = vmatprep.subr.mxu0 0.0
    %1459 = vmatpush1.msra.mxu0 0.0
    %1460 = vmatprep.subr.mxu0 0.0
    %1461 = vmatpush1.msra.mxu0 0.0
    %1462 = vmatprep.subr.mxu0 0.0
    %1463 = vmatpush1.msra.mxu0 0.0
    %1464 = vmatprep.subr.mxu0 0.0
    %1465 = vmatpush1.msra.mxu0 0.0
    %1466 = vmatprep.subr.mxu0 0.0
    %1467 = vmatpush1.msra.mxu0 0.0
    %1468 = vmatprep.subr.mxu0 0.0
    %1469 = vmatpush1.msra.mxu0 0.0
    %1470 = vmatprep.subr.mxu0 0.0
    %1471 = vmatpush1.msra.mxu0 0.0
    %1472 = vmatprep.subr.mxu0 0.0
    %1473 = vmatpush1.msra.mxu0 0.0
    %1474 = vmatprep.subr.mxu0 0.0
    %1475 = vmatpush1.msra.mxu0 0.0
    %1476 = vmatprep.subr.mxu0 0.0
    %1477 = vmatpush1.msra.mxu0 0.0
    %1478 = vmatprep.subr.mxu0 0.0
    %1479 = vmatpush1.msra.mxu0 0.0
    %1480 = vmatprep.subr.mxu0 0.0
    %1481 = vmatpush1.msra.mxu0 0.0
    %1482 = vmatprep.subr.mxu0 0.0
    %1483 = vmatpush1.msra.mxu0 0.0
    %1484 = vmatprep.subr.mxu0 0.0
    %1485 = vmatpush1.msra.mxu0 0.0
    %1486 = vmatprep.subr.mxu0 0.0
    %1487 = vmatpush1.msra.mxu0 %v1450
    %1488 = vmatprep.subr.mxu0 0.0
    %1489 = vmatpush2.msra.mxu0 0.0
    %1490 = vmatprep.subr.mxu0 0.0
    %1491 = vmatpush2.msra.mxu0 0.0
    %1492 = vmatprep.subr.mxu0 0.0
    %1493 = vmatpush2.msra.mxu0 0.0
    %1494 = vmatprep.subr.mxu0 0.0
    %1495 = vmatpush2.msra.mxu0 0.0
    %1496 = vmatprep.subr.mxu0 0.0
    %1497 = vmatpush2.msra.mxu0 0.0
    %1498 = vmatprep.subr.mxu0 0.0
    %1499 = vmatpush2.msra.mxu0 0.0
    %1500 = vmatprep.subr.mxu0 0.0
    %1501 = vmatpush2.msra.mxu0 0.0
    %1502 = vmatprep.subr.mxu0 0.0
    %1503 = vmatpush2.msra.mxu0 0.0
    %1504 = vmatprep.subr.mxu0 0.0
    %1505 = vmatpush2.msra.mxu0 0.0
    %1506 = vmatprep.subr.mxu0 0.0
    %1507 = vmatpush2.msra.mxu0 0.0
    %1508 = vmatprep.subr.mxu0 0.0
    %1509 = vmatpush2.msra.mxu0 0.0
    %1510 = vmatprep.subr.mxu0 0.0
    %1511 = vmatpush2.msra.mxu0 0.0
    %1512 = vmatprep.subr.mxu0 0.0
    %1513 = vmatpush2.msra.mxu0 0.0
    %1514 = vmatprep.subr.mxu0 0.0
    %1515 = vmatpush2.msra.mxu0 0.0
    %1516 = vmatprep.subr.mxu0 0.0
    %1517 = vmatpush2.msra.mxu0 0.0
    %1518 = vmatprep.subr.mxu0 0.0
    %1519 = vmatpush2.msra.mxu0 0.0
    %1520 = vmatprep.mubr.f32.mxu0 0.0
    %1521 = vmatmul.mubr.f32.gmra.mxu0 %v1454
    %v1522 = vpop.f32.mrf.mxu0
    %v1523 = vadd.f32 0.0, %v1522
    %v1524 = vpop.f32.mrf.mxu0
    %1525 = vdwg.mxu0
    %v1526 = vld [vmem:[%s8] sm:$0xff]
    %v1527 = vld [vmem:[%s8 + $0x8] sm:$0xff]
    %v1528 = vld [vmem:[%s8 + $0x10] sm:$0xff]
    %v1529 = vld [vmem:[%s8 + $0x18] sm:$0xff]
    %v1530 = vld [vmem:[%s8 + $0x20] sm:$0xff]
    %v1531 = vld [vmem:[%s8 + $0x28] sm:$0xff]
    %v1532 = vld [vmem:[%s8 + $0x30] sm:$0xff]
    %v1533 = vld [vmem:[%s8 + $0x38] sm:$0xff]
    %s1534 = scalar_lea.vmem [#allocation7], 4
    %v1535 = vld [vmem:[%s1534] sm:$0xf]
    %v1537 = vsel %vm1452, %v1535, 0
    %1539 = vmatprep.subr.mxu0 0.0
    %1540 = vmatpush1.msra.mxu0 0.0
    %1541 = vmatprep.subr.mxu0 0.0
    %1542 = vmatpush1.msra.mxu0 0.0
    %1543 = vmatprep.subr.mxu0 0.0
    %1544 = vmatpush1.msra.mxu0 0.0
    %1545 = vmatprep.subr.mxu0 0.0
    %1546 = vmatpush1.msra.mxu0 0.0
    %1547 = vmatprep.subr.mxu0 0.0
    %1548 = vmatpush1.msra.mxu0 0.0
    %1549 = vmatprep.subr.mxu0 0.0
    %1550 = vmatpush1.msra.mxu0 0.0
    %1551 = vmatprep.subr.mxu0 0.0
    %1552 = vmatpush1.msra.mxu0 0.0
    %1553 = vmatprep.subr.mxu0 0.0
    %1554 = vmatpush1.msra.mxu0 0.0
    %1555 = vmatprep.subr.mxu0 0.0
    %1556 = vmatpush1.msra.mxu0 0.0
    %1557 = vmatprep.subr.mxu0 0.0
    %1558 = vmatpush1.msra.mxu0 0.0
    %1559 = vmatprep.subr.mxu0 0.0
    %1560 = vmatpush1.msra.mxu0 0.0
    %1561 = vmatprep.subr.mxu0 0.0
    %1562 = vmatpush1.msra.mxu0 0.0
    %1563 = vmatprep.subr.mxu0 0.0
    %1564 = vmatpush1.msra.mxu0 0.0
    %1565 = vmatprep.subr.mxu0 0.0
    %1566 = vmatpush1.msra.mxu0 0.0
    %1567 = vmatprep.subr.mxu0 0.0
    %1568 = vmatpush1.msra.mxu0 0.0
    %1569 = vmatprep.subr.mxu0 0.0
    %1570 = vmatpush1.msra.mxu0 %v1450
    %1571 = vmatprep.subr.mxu0 0.0
    %1572 = vmatpush2.msra.mxu0 0.0
    %1573 = vmatprep.subr.mxu0 0.0
    %1574 = vmatpush2.msra.mxu0 0.0
    %1575 = vmatprep.subr.mxu0 0.0
    %1576 = vmatpush2.msra.mxu0 0.0
    %1577 = vmatprep.subr.mxu0 0.0
    %1578 = vmatpush2.msra.mxu0 0.0
    %1579 = vmatprep.subr.mxu0 0.0
    %1580 = vmatpush2.msra.mxu0 0.0
    %1581 = vmatprep.subr.mxu0 0.0
    %1582 = vmatpush2.msra.mxu0 0.0
    %1583 = vmatprep.subr.mxu0 0.0
    %1584 = vmatpush2.msra.mxu0 0.0
    %1585 = vmatprep.subr.mxu0 0.0
    %1586 = vmatpush2.msra.mxu0 0.0
    %1587 = vmatprep.subr.mxu0 0.0
    %1588 = vmatpush2.msra.mxu0 0.0
    %1589 = vmatprep.subr.mxu0 0.0
    %1590 = vmatpush2.msra.mxu0 0.0
    %1591 = vmatprep.subr.mxu0 0.0
    %1592 = vmatpush2.msra.mxu0 0.0
    %1593 = vmatprep.subr.mxu0 0.0
    %1594 = vmatpush2.msra.mxu0 0.0
    %1595 = vmatprep.subr.mxu0 0.0
    %1596 = vmatpush2.msra.mxu0 0.0
    %1597 = vmatprep.subr.mxu0 0.0
    %1598 = vmatpush2.msra.mxu0 0.0
    %1599 = vmatprep.subr.mxu0 0.0
    %1600 = vmatpush2.msra.mxu0 0.0
    %1601 = vmatprep.subr.mxu0 0.0
    %1602 = vmatpush2.msra.mxu0 0.0
    %1603 = vmatprep.mubr.f32.mxu0 0.0
    %1604 = vmatmul.mubr.f32.gmra.mxu0 %v1537
    %v1605 = vpop.f32.mrf.mxu0
    %v1606 = vadd.f32 0.0, %v1605
    %v1607 = vpop.f32.mrf.mxu0
    %1608 = vdwg.mxu0
    %s1609 = scalar_lea.vmem %s8, 64
    %v1610 = vld [vmem:[%s1609] sm:$0xff]
    %v1611 = vld [vmem:[%s1609 + $0x8] sm:$0xff]
    %v1612 = vld [vmem:[%s1609 + $0x10] sm:$0xff]
    %v1613 = vld [vmem:[%s1609 + $0x18] sm:$0xff]
    %v1614 = vld [vmem:[%s1609 + $0x20] sm:$0xff]
    %v1615 = vld [vmem:[%s1609 + $0x28] sm:$0xff]
    %v1616 = vld [vmem:[%s1609 + $0x30] sm:$0xff]
    %v1617 = vld [vmem:[%s1609 + $0x38] sm:$0xff]
    %v1619 = vsel %vm281, %v1606, 0
    %1621 = vmatprep.subr.mxu0 0.0
    %1622 = vmatpush1.msra.mxu0 0.0
    %1623 = vmatprep.subr.mxu0 0.0
    %1624 = vmatpush1.msra.mxu0 0.0
    %1625 = vmatprep.subr.mxu0 0.0
    %1626 = vmatpush1.msra.mxu0 0.0
    %1627 = vmatprep.subr.mxu0 0.0
    %1628 = vmatpush1.msra.mxu0 0.0
    %1629 = vmatprep.subr.mxu0 0.0
    %1630 = vmatpush1.msra.mxu0 0.0
    %1631 = vmatprep.subr.mxu0 0.0
    %1632 = vmatpush1.msra.mxu0 0.0
    %1633 = vmatprep.subr.mxu0 0.0
    %1634 = vmatpush1.msra.mxu0 0.0
    %1635 = vmatprep.subr.mxu0 0.0
    %1636 = vmatpush1.msra.mxu0 0.0
    %1637 = vmatprep.subr.mxu0 0.0
    %1638 = vmatpush1.msra.mxu0 %v1617
    %1639 = vmatprep.subr.mxu0 0.0
    %1640 = vmatpush1.msra.mxu0 %v1616
    %1641 = vmatprep.subr.mxu0 0.0
    %1642 = vmatpush1.msra.mxu0 %v1615
    %1643 = vmatprep.subr.mxu0 0.0
    %1644 = vmatpush1.msra.mxu0 %v1614
    %1645 = vmatprep.subr.mxu0 0.0
    %1646 = vmatpush1.msra.mxu0 %v1613
    %1647 = vmatprep.subr.mxu0 0.0
    %1648 = vmatpush1.msra.mxu0 %v1612
    %1649 = vmatprep.subr.mxu0 0.0
    %1650 = vmatpush1.msra.mxu0 %v1611
    %1651 = vmatprep.subr.mxu0 0.0
    %1652 = vmatpush1.msra.mxu0 %v1610
    %1653 = vmatprep.subr.mxu0 0.0
    %1654 = vmatpush2.msra.mxu0 0.0
    %1655 = vmatprep.subr.mxu0 0.0
    %1656 = vmatpush2.msra.mxu0 0.0
    %1657 = vmatprep.subr.mxu0 0.0
    %1658 = vmatpush2.msra.mxu0 0.0
    %1659 = vmatprep.subr.mxu0 0.0
    %1660 = vmatpush2.msra.mxu0 0.0
    %1661 = vmatprep.subr.mxu0 0.0
    %1662 = vmatpush2.msra.mxu0 0.0
    %1663 = vmatprep.subr.mxu0 0.0
    %1664 = vmatpush2.msra.mxu0 0.0
    %1665 = vmatprep.subr.mxu0 0.0
    %1666 = vmatpush2.msra.mxu0 0.0
    %1667 = vmatprep.subr.mxu0 0.0
    %1668 = vmatpush2.msra.mxu0 0.0
    %1669 = vmatprep.subr.mxu0 0.0
    %1670 = vmatpush2.msra.mxu0 0.0
    %1671 = vmatprep.subr.mxu0 0.0
    %1672 = vmatpush2.msra.mxu0 0.0
    %1673 = vmatprep.subr.mxu0 0.0
    %1674 = vmatpush2.msra.mxu0 0.0
    %1675 = vmatprep.subr.mxu0 0.0
    %1676 = vmatpush2.msra.mxu0 0.0
    %1677 = vmatprep.subr.mxu0 0.0
    %1678 = vmatpush2.msra.mxu0 0.0
    %1679 = vmatprep.subr.mxu0 0.0
    %1680 = vmatpush2.msra.mxu0 0.0
    %1681 = vmatprep.subr.mxu0 0.0
    %1682 = vmatpush2.msra.mxu0 0.0
    %1683 = vmatprep.subr.mxu0 0.0
    %1684 = vmatpush2.msra.mxu0 0.0
    %1685 = vmatprep.mubr.f32.mxu0 0.0
    %1686 = vmatmul.mubr.f32.gmra.mxu0 %v1619
    %v1687 = vpop.f32.mrf.mxu0
    %v1688 = vadd.f32 0.0, %v1687
    %v1689 = vpop.f32.mrf.mxu0
    %1690 = vdwg.mxu0
    %v1692 = vsel %vm281, %v1523, 0
    %1694 = vmatprep.subr.mxu0 0.0
    %1695 = vmatpush1.msra.mxu0 0.0
    %1696 = vmatprep.subr.mxu0 0.0
    %1697 = vmatpush1.msra.mxu0 0.0
    %1698 = vmatprep.subr.mxu0 0.0
    %1699 = vmatpush1.msra.mxu0 0.0
    %1700 = vmatprep.subr.mxu0 0.0
    %1701 = vmatpush1.msra.mxu0 0.0
    %1702 = vmatprep.subr.mxu0 0.0
    %1703 = vmatpush1.msra.mxu0 0.0
    %1704 = vmatprep.subr.mxu0 0.0
    %1705 = vmatpush1.msra.mxu0 0.0
    %1706 = vmatprep.subr.mxu0 0.0
    %1707 = vmatpush1.msra.mxu0 0.0
    %1708 = vmatprep.subr.mxu0 0.0
    %1709 = vmatpush1.msra.mxu0 0.0
    %1710 = vmatprep.subr.mxu0 0.0
    %1711 = vmatpush1.msra.mxu0 %v1533
    %1712 = vmatprep.subr.mxu0 0.0
    %1713 = vmatpush1.msra.mxu0 %v1532
    %1714 = vmatprep.subr.mxu0 0.0
    %1715 = vmatpush1.msra.mxu0 %v1531
    %1716 = vmatprep.subr.mxu0 0.0
    %1717 = vmatpush1.msra.mxu0 %v1530
    %1718 = vmatprep.subr.mxu0 0.0
    %1719 = vmatpush1.msra.mxu0 %v1529
    %1720 = vmatprep.subr.mxu0 0.0
    %1721 = vmatpush1.msra.mxu0 %v1528
    %1722 = vmatprep.subr.mxu0 0.0
    %1723 = vmatpush1.msra.mxu0 %v1527
    %1724 = vmatprep.subr.mxu0 0.0
    %1725 = vmatpush1.msra.mxu0 %v1526
    %1726 = vmatprep.subr.mxu0 0.0
    %1727 = vmatpush2.msra.mxu0 0.0
    %1728 = vmatprep.subr.mxu0 0.0
    %1729 = vmatpush2.msra.mxu0 0.0
    %1730 = vmatprep.subr.mxu0 0.0
    %1731 = vmatpush2.msra.mxu0 0.0
    %1732 = vmatprep.subr.mxu0 0.0
    %1733 = vmatpush2.msra.mxu0 0.0
    %1734 = vmatprep.subr.mxu0 0.0
    %1735 = vmatpush2.msra.mxu0 0.0
    %1736 = vmatprep.subr.mxu0 0.0
    %1737 = vmatpush2.msra.mxu0 0.0
    %1738 = vmatprep.subr.mxu0 0.0
    %1739 = vmatpush2.msra.mxu0 0.0
    %1740 = vmatprep.subr.mxu0 0.0
    %1741 = vmatpush2.msra.mxu0 0.0
    %1742 = vmatprep.subr.mxu0 0.0
    %1743 = vmatpush2.msra.mxu0 0.0
    %1744 = vmatprep.subr.mxu0 0.0
    %1745 = vmatpush2.msra.mxu0 0.0
    %1746 = vmatprep.subr.mxu0 0.0
    %1747 = vmatpush2.msra.mxu0 0.0
    %1748 = vmatprep.subr.mxu0 0.0
    %1749 = vmatpush2.msra.mxu0 0.0
    %1750 = vmatprep.subr.mxu0 0.0
    %1751 = vmatpush2.msra.mxu0 0.0
    %1752 = vmatprep.subr.mxu0 0.0
    %1753 = vmatpush2.msra.mxu0 0.0
    %1754 = vmatprep.subr.mxu0 0.0
    %1755 = vmatpush2.msra.mxu0 0.0
    %1756 = vmatprep.subr.mxu0 0.0
    %1757 = vmatpush2.msra.mxu0 0.0
    %1758 = vmatprep.mubr.f32.mxu0 0.0
    %1759 = vmatmul.mubr.f32.gmra.mxu0 %v1692
    %v1760 = vpop.f32.mrf.mxu0
    %v1761 = vadd.f32 %v1688, %v1760
    %v1762 = vpop.f32.mrf.mxu0
    %1763 = vdwg.mxu0
    %s1764 = scalar_lea.vmem [#allocation7], 8
    %v1765 = vld [vmem:[%s1764] sm:$0xf]
    %v1767 = vsel %vm1452, %v1765, 0
    %1769 = vmatprep.subr.mxu0 0.0
    %1770 = vmatpush1.msra.mxu0 0.0
    %1771 = vmatprep.subr.mxu0 0.0
    %1772 = vmatpush1.msra.mxu0 0.0
    %1773 = vmatprep.subr.mxu0 0.0
    %1774 = vmatpush1.msra.mxu0 0.0
    %1775 = vmatprep.subr.mxu0 0.0
    %1776 = vmatpush1.msra.mxu0 0.0
    %1777 = vmatprep.subr.mxu0 0.0
    %1778 = vmatpush1.msra.mxu0 0.0
    %1779 = vmatprep.subr.mxu0 0.0
    %1780 = vmatpush1.msra.mxu0 0.0
    %1781 = vmatprep.subr.mxu0 0.0
    %1782 = vmatpush1.msra.mxu0 0.0
    %1783 = vmatprep.subr.mxu0 0.0
    %1784 = vmatpush1.msra.mxu0 0.0
    %1785 = vmatprep.subr.mxu0 0.0
    %1786 = vmatpush1.msra.mxu0 0.0
    %1787 = vmatprep.subr.mxu0 0.0
    %1788 = vmatpush1.msra.mxu0 0.0
    %1789 = vmatprep.subr.mxu0 0.0
    %1790 = vmatpush1.msra.mxu0 0.0
    %1791 = vmatprep.subr.mxu0 0.0
    %1792 = vmatpush1.msra.mxu0 0.0
    %1793 = vmatprep.subr.mxu0 0.0
    %1794 = vmatpush1.msra.mxu0 0.0
    %1795 = vmatprep.subr.mxu0 0.0
    %1796 = vmatpush1.msra.mxu0 0.0
    %1797 = vmatprep.subr.mxu0 0.0
    %1798 = vmatpush1.msra.mxu0 0.0
    %1799 = vmatprep.subr.mxu0 0.0
    %1800 = vmatpush1.msra.mxu0 %v1450
    %1801 = vmatprep.subr.mxu0 0.0
    %1802 = vmatpush2.msra.mxu0 0.0
    %1803 = vmatprep.subr.mxu0 0.0
    %1804 = vmatpush2.msra.mxu0 0.0
    %1805 = vmatprep.subr.mxu0 0.0
    %1806 = vmatpush2.msra.mxu0 0.0
    %1807 = vmatprep.subr.mxu0 0.0
    %1808 = vmatpush2.msra.mxu0 0.0
    %1809 = vmatprep.subr.mxu0 0.0
    %1810 = vmatpush2.msra.mxu0 0.0
    %1811 = vmatprep.subr.mxu0 0.0
    %1812 = vmatpush2.msra.mxu0 0.0
    %1813 = vmatprep.subr.mxu0 0.0
    %1814 = vmatpush2.msra.mxu0 0.0
    %1815 = vmatprep.subr.mxu0 0.0
    %1816 = vmatpush2.msra.mxu0 0.0
    %1817 = vmatprep.subr.mxu0 0.0
    %1818 = vmatpush2.msra.mxu0 0.0
    %1819 = vmatprep.subr.mxu0 0.0
    %1820 = vmatpush2.msra.mxu0 0.0
    %1821 = vmatprep.subr.mxu0 0.0
    %1822 = vmatpush2.msra.mxu0 0.0
    %1823 = vmatprep.subr.mxu0 0.0
    %1824 = vmatpush2.msra.mxu0 0.0
    %1825 = vmatprep.subr.mxu0 0.0
    %1826 = vmatpush2.msra.mxu0 0.0
    %1827 = vmatprep.subr.mxu0 0.0
    %1828 = vmatpush2.msra.mxu0 0.0
    %1829 = vmatprep.subr.mxu0 0.0
    %1830 = vmatpush2.msra.mxu0 0.0
    %1831 = vmatprep.subr.mxu0 0.0
    %1832 = vmatpush2.msra.mxu0 0.0
    %1833 = vmatprep.mubr.f32.mxu0 0.0
    %1834 = vmatmul.mubr.f32.gmra.mxu0 %v1767
    %v1835 = vpop.f32.mrf.mxu0
    %v1836 = vadd.f32 0.0, %v1835
    %v1837 = vpop.f32.mrf.mxu0
    %1838 = vdwg.mxu0
    %s1839 = scalar_lea.vmem %s8, 128
    %v1840 = vld [vmem:[%s1839] sm:$0xff]
    %v1841 = vld [vmem:[%s1839 + $0x8] sm:$0xff]
    %v1842 = vld [vmem:[%s1839 + $0x10] sm:$0xff]
    %v1843 = vld [vmem:[%s1839 + $0x18] sm:$0xff]
    %v1844 = vld [vmem:[%s1839 + $0x20] sm:$0xff]
    %v1845 = vld [vmem:[%s1839 + $0x28] sm:$0xff]
    %v1846 = vld [vmem:[%s1839 + $0x30] sm:$0xff]
    %v1847 = vld [vmem:[%s1839 + $0x38] sm:$0xff]
    %v1849 = vsel %vm281, %v1836, 0
    %1851 = vmatprep.subr.mxu0 0.0
    %1852 = vmatpush1.msra.mxu0 0.0
    %1853 = vmatprep.subr.mxu0 0.0
    %1854 = vmatpush1.msra.mxu0 0.0
    %1855 = vmatprep.subr.mxu0 0.0
    %1856 = vmatpush1.msra.mxu0 0.0
    %1857 = vmatprep.subr.mxu0 0.0
    %1858 = vmatpush1.msra.mxu0 0.0
    %1859 = vmatprep.subr.mxu0 0.0
    %1860 = vmatpush1.msra.mxu0 0.0
    %1861 = vmatprep.subr.mxu0 0.0
    %1862 = vmatpush1.msra.mxu0 0.0
    %1863 = vmatprep.subr.mxu0 0.0
    %1864 = vmatpush1.msra.mxu0 0.0
    %1865 = vmatprep.subr.mxu0 0.0
    %1866 = vmatpush1.msra.mxu0 0.0
    %1867 = vmatprep.subr.mxu0 0.0
    %1868 = vmatpush1.msra.mxu0 %v1847
    %1869 = vmatprep.subr.mxu0 0.0
    %1870 = vmatpush1.msra.mxu0 %v1846
    %1871 = vmatprep.subr.mxu0 0.0
    %1872 = vmatpush1.msra.mxu0 %v1845
    %1873 = vmatprep.subr.mxu0 0.0
    %1874 = vmatpush1.msra.mxu0 %v1844
    %1875 = vmatprep.subr.mxu0 0.0
    %1876 = vmatpush1.msra.mxu0 %v1843
    %1877 = vmatprep.subr.mxu0 0.0
    %1878 = vmatpush1.msra.mxu0 %v1842
    %1879 = vmatprep.subr.mxu0 0.0
    %1880 = vmatpush1.msra.mxu0 %v1841
    %1881 = vmatprep.subr.mxu0 0.0
    %1882 = vmatpush1.msra.mxu0 %v1840
    %1883 = vmatprep.subr.mxu0 0.0
    %1884 = vmatpush2.msra.mxu0 0.0
    %1885 = vmatprep.subr.mxu0 0.0
    %1886 = vmatpush2.msra.mxu0 0.0
    %1887 = vmatprep.subr.mxu0 0.0
    %1888 = vmatpush2.msra.mxu0 0.0
    %1889 = vmatprep.subr.mxu0 0.0
    %1890 = vmatpush2.msra.mxu0 0.0
    %1891 = vmatprep.subr.mxu0 0.0
    %1892 = vmatpush2.msra.mxu0 0.0
    %1893 = vmatprep.subr.mxu0 0.0
    %1894 = vmatpush2.msra.mxu0 0.0
    %1895 = vmatprep.subr.mxu0 0.0
    %1896 = vmatpush2.msra.mxu0 0.0
    %1897 = vmatprep.subr.mxu0 0.0
    %1898 = vmatpush2.msra.mxu0 0.0
    %1899 = vmatprep.subr.mxu0 0.0
    %1900 = vmatpush2.msra.mxu0 0.0
    %1901 = vmatprep.subr.mxu0 0.0
    %1902 = vmatpush2.msra.mxu0 0.0
    %1903 = vmatprep.subr.mxu0 0.0
    %1904 = vmatpush2.msra.mxu0 0.0
    %1905 = vmatprep.subr.mxu0 0.0
    %1906 = vmatpush2.msra.mxu0 0.0
    %1907 = vmatprep.subr.mxu0 0.0
    %1908 = vmatpush2.msra.mxu0 0.0
    %1909 = vmatprep.subr.mxu0 0.0
    %1910 = vmatpush2.msra.mxu0 0.0
    %1911 = vmatprep.subr.mxu0 0.0
    %1912 = vmatpush2.msra.mxu0 0.0
    %1913 = vmatprep.subr.mxu0 0.0
    %1914 = vmatpush2.msra.mxu0 0.0
    %1915 = vmatprep.mubr.f32.mxu0 0.0
    %1916 = vmatmul.mubr.f32.gmra.mxu0 %v1849
    %v1917 = vpop.f32.mrf.mxu0
    %v1918 = vadd.f32 0.0, %v1917
    %v1919 = vpop.f32.mrf.mxu0
    %1920 = vdwg.mxu0
    %v1921 = vadd.f32 %v1761, %v1918
    %s1922 = scalar_lea.vmem [#allocation7], 12
    %v1923 = vld [vmem:[%s1922] sm:$0xf]
    %v1925 = vsel %vm1452, %v1923, 0
    %1927 = vmatprep.subr.mxu0 0.0
    %1928 = vmatpush1.msra.mxu0 0.0
    %1929 = vmatprep.subr.mxu0 0.0
    %1930 = vmatpush1.msra.mxu0 0.0
    %1931 = vmatprep.subr.mxu0 0.0
    %1932 = vmatpush1.msra.mxu0 0.0
    %1933 = vmatprep.subr.mxu0 0.0
    %1934 = vmatpush1.msra.mxu0 0.0
    %1935 = vmatprep.subr.mxu0 0.0
    %1936 = vmatpush1.msra.mxu0 0.0
    %1937 = vmatprep.subr.mxu0 0.0
    %1938 = vmatpush1.msra.mxu0 0.0
    %1939 = vmatprep.subr.mxu0 0.0
    %1940 = vmatpush1.msra.mxu0 0.0
    %1941 = vmatprep.subr.mxu0 0.0
    %1942 = vmatpush1.msra.mxu0 0.0
    %1943 = vmatprep.subr.mxu0 0.0
    %1944 = vmatpush1.msra.mxu0 0.0
    %1945 = vmatprep.subr.mxu0 0.0
    %1946 = vmatpush1.msra.mxu0 0.0
    %1947 = vmatprep.subr.mxu0 0.0
    %1948 = vmatpush1.msra.mxu0 0.0
    %1949 = vmatprep.subr.mxu0 0.0
    %1950 = vmatpush1.msra.mxu0 0.0
    %1951 = vmatprep.subr.mxu0 0.0
    %1952 = vmatpush1.msra.mxu0 0.0
    %1953 = vmatprep.subr.mxu0 0.0
    %1954 = vmatpush1.msra.mxu0 0.0
    %1955 = vmatprep.subr.mxu0 0.0
    %1956 = vmatpush1.msra.mxu0 0.0
    %1957 = vmatprep.subr.mxu0 0.0
    %1958 = vmatpush1.msra.mxu0 %v1450
    %1959 = vmatprep.subr.mxu0 0.0
    %1960 = vmatpush2.msra.mxu0 0.0
    %1961 = vmatprep.subr.mxu0 0.0
    %1962 = vmatpush2.msra.mxu0 0.0
    %1963 = vmatprep.subr.mxu0 0.0
    %1964 = vmatpush2.msra.mxu0 0.0
    %1965 = vmatprep.subr.mxu0 0.0
    %1966 = vmatpush2.msra.mxu0 0.0
    %1967 = vmatprep.subr.mxu0 0.0
    %1968 = vmatpush2.msra.mxu0 0.0
    %1969 = vmatprep.subr.mxu0 0.0
    %1970 = vmatpush2.msra.mxu0 0.0
    %1971 = vmatprep.subr.mxu0 0.0
    %1972 = vmatpush2.msra.mxu0 0.0
    %1973 = vmatprep.subr.mxu0 0.0
    %1974 = vmatpush2.msra.mxu0 0.0
    %1975 = vmatprep.subr.mxu0 0.0
    %1976 = vmatpush2.msra.mxu0 0.0
    %1977 = vmatprep.subr.mxu0 0.0
    %1978 = vmatpush2.msra.mxu0 0.0
    %1979 = vmatprep.subr.mxu0 0.0
    %1980 = vmatpush2.msra.mxu0 0.0
    %1981 = vmatprep.subr.mxu0 0.0
    %1982 = vmatpush2.msra.mxu0 0.0
    %1983 = vmatprep.subr.mxu0 0.0
    %1984 = vmatpush2.msra.mxu0 0.0
    %1985 = vmatprep.subr.mxu0 0.0
    %1986 = vmatpush2.msra.mxu0 0.0
    %1987 = vmatprep.subr.mxu0 0.0
    %1988 = vmatpush2.msra.mxu0 0.0
    %1989 = vmatprep.subr.mxu0 0.0
    %1990 = vmatpush2.msra.mxu0 0.0
    %1991 = vmatprep.mubr.f32.mxu0 0.0
    %1992 = vmatmul.mubr.f32.gmra.mxu0 %v1925
    %v1993 = vpop.f32.mrf.mxu0
    %v1994 = vadd.f32 0.0, %v1993
    %v1995 = vpop.f32.mrf.mxu0
    %1996 = vdwg.mxu0
    %s1997 = scalar_lea.vmem %s8, 192
    %v1998 = vld [vmem:[%s1997] sm:$0xff]
    %v1999 = vld [vmem:[%s1997 + $0x8] sm:$0xff]
    %v2000 = vld [vmem:[%s1997 + $0x10] sm:$0xff]
    %v2001 = vld [vmem:[%s1997 + $0x18] sm:$0xff]
    %v2002 = vld [vmem:[%s1997 + $0x20] sm:$0xff]
    %v2003 = vld [vmem:[%s1997 + $0x28] sm:$0xff]
    %v2004 = vld [vmem:[%s1997 + $0x30] sm:$0xff]
    %v2005 = vld [vmem:[%s1997 + $0x38] sm:$0xff]
    %v2007 = vsel %vm281, %v1994, 0
    %2009 = vmatprep.subr.mxu0 0.0
    %2010 = vmatpush1.msra.mxu0 0.0
    %2011 = vmatprep.subr.mxu0 0.0
    %2012 = vmatpush1.msra.mxu0 0.0
    %2013 = vmatprep.subr.mxu0 0.0
    %2014 = vmatpush1.msra.mxu0 0.0
    %2015 = vmatprep.subr.mxu0 0.0
    %2016 = vmatpush1.msra.mxu0 0.0
    %2017 = vmatprep.subr.mxu0 0.0
    %2018 = vmatpush1.msra.mxu0 0.0
    %2019 = vmatprep.subr.mxu0 0.0
    %2020 = vmatpush1.msra.mxu0 0.0
    %2021 = vmatprep.subr.mxu0 0.0
    %2022 = vmatpush1.msra.mxu0 0.0
    %2023 = vmatprep.subr.mxu0 0.0
    %2024 = vmatpush1.msra.mxu0 0.0
    %2025 = vmatprep.subr.mxu0 0.0
    %2026 = vmatpush1.msra.mxu0 %v2005
    %2027 = vmatprep.subr.mxu0 0.0
    %2028 = vmatpush1.msra.mxu0 %v2004
    %2029 = vmatprep.subr.mxu0 0.0
    %2030 = vmatpush1.msra.mxu0 %v2003
    %2031 = vmatprep.subr.mxu0 0.0
    %2032 = vmatpush1.msra.mxu0 %v2002
    %2033 = vmatprep.subr.mxu0 0.0
    %2034 = vmatpush1.msra.mxu0 %v2001
    %2035 = vmatprep.subr.mxu0 0.0
    %2036 = vmatpush1.msra.mxu0 %v2000
    %2037 = vmatprep.subr.mxu0 0.0
    %2038 = vmatpush1.msra.mxu0 %v1999
    %2039 = vmatprep.subr.mxu0 0.0
    %2040 = vmatpush1.msra.mxu0 %v1998
    %2041 = vmatprep.subr.mxu0 0.0
    %2042 = vmatpush2.msra.mxu0 0.0
    %2043 = vmatprep.subr.mxu0 0.0
    %2044 = vmatpush2.msra.mxu0 0.0
    %2045 = vmatprep.subr.mxu0 0.0
    %2046 = vmatpush2.msra.mxu0 0.0
    %2047 = vmatprep.subr.mxu0 0.0
    %2048 = vmatpush2.msra.mxu0 0.0
    %2049 = vmatprep.subr.mxu0 0.0
    %2050 = vmatpush2.msra.mxu0 0.0
    %2051 = vmatprep.subr.mxu0 0.0
    %2052 = vmatpush2.msra.mxu0 0.0
    %2053 = vmatprep.subr.mxu0 0.0
    %2054 = vmatpush2.msra.mxu0 0.0
    %2055 = vmatprep.subr.mxu0 0.0
    %2056 = vmatpush2.msra.mxu0 0.0
    %2057 = vmatprep.subr.mxu0 0.0
    %2058 = vmatpush2.msra.mxu0 0.0
    %2059 = vmatprep.subr.mxu0 0.0
    %2060 = vmatpush2.msra.mxu0 0.0
    %2061 = vmatprep.subr.mxu0 0.0
    %2062 = vmatpush2.msra.mxu0 0.0
    %2063 = vmatprep.subr.mxu0 0.0
    %2064 = vmatpush2.msra.mxu0 0.0
    %2065 = vmatprep.subr.mxu0 0.0
    %2066 = vmatpush2.msra.mxu0 0.0
    %2067 = vmatprep.subr.mxu0 0.0
    %2068 = vmatpush2.msra.mxu0 0.0
    %2069 = vmatprep.subr.mxu0 0.0
    %2070 = vmatpush2.msra.mxu0 0.0
    %2071 = vmatprep.subr.mxu0 0.0
    %2072 = vmatpush2.msra.mxu0 0.0
    %2073 = vmatprep.mubr.f32.mxu0 0.0
    %2074 = vmatmul.mubr.f32.gmra.mxu0 %v2007
    %v2075 = vpop.f32.mrf.mxu0
    %v2076 = vadd.f32 0.0, %v2075
    %v2077 = vpop.f32.mrf.mxu0
    %2078 = vdwg.mxu0
    %v2079 = vadd.f32 %v1921, %v2076
    %v2080 = vld [vmem:[%s9] sm:$0x1]
    %v2082 = vlaneseq
    %v2083 = vshrl.u32 %v2082, 7
    %v2084 = vsub.s32 0, %v2083
    %v2085 = vrot.slane %v2080, %v2084
    %v2087 = vadd.f32 %v2079, %v2085
    %vm2088 = vcmp.ge.f32.partialorder %v2087, 0.0
    %v2089 = vmul.f32 %v2087, 0.2
    %v2090 = vsel %vm2088, %v2087, %v2089
    %v2091 = vld [vmem:[%s10] sm:$0x3]
    %vm2092 = vcmask 31744
    %v2094 = vsel %vm2092, %v2091, 0
    %vm2096 = vcmask 1043456
    %v2098 = vsel %vm2096, %v2090, 0
    %2100 = vmatprep.subr.mxu0 0.0
    %2101 = vmatpush1.msra.mxu0 0.0
    %2102 = vmatprep.subr.mxu0 0.0
    %2103 = vmatpush1.msra.mxu0 0.0
    %2104 = vmatprep.subr.mxu0 0.0
    %2105 = vmatpush1.msra.mxu0 0.0
    %2106 = vmatprep.subr.mxu0 0.0
    %2107 = vmatpush1.msra.mxu0 0.0
    %2108 = vmatprep.subr.mxu0 0.0
    %2109 = vmatpush1.msra.mxu0 0.0
    %2110 = vmatprep.subr.mxu0 0.0
    %2111 = vmatpush1.msra.mxu0 0.0
    %2112 = vmatprep.subr.mxu0 0.0
    %2113 = vmatpush1.msra.mxu0 0.0
    %2114 = vmatprep.subr.mxu0 0.0
    %2115 = vmatpush1.msra.mxu0 0.0
    %2116 = vmatprep.subr.mxu0 0.0
    %2117 = vmatpush1.msra.mxu0 0.0
    %2118 = vmatprep.subr.mxu0 0.0
    %2119 = vmatpush1.msra.mxu0 0.0
    %2120 = vmatprep.subr.mxu0 0.0
    %2121 = vmatpush1.msra.mxu0 0.0
    %2122 = vmatprep.subr.mxu0 0.0
    %2123 = vmatpush1.msra.mxu0 0.0
    %2124 = vmatprep.subr.mxu0 0.0
    %2125 = vmatpush1.msra.mxu0 0.0
    %2126 = vmatprep.subr.mxu0 0.0
    %2127 = vmatpush1.msra.mxu0 0.0
    %2128 = vmatprep.subr.mxu0 0.0
    %2129 = vmatpush1.msra.mxu0 0.0
    %2130 = vmatprep.subr.mxu0 0.0
    %2131 = vmatpush1.msra.mxu0 %v2098
    %2132 = vmatprep.subr.mxu0 0.0
    %2133 = vmatpush2.msra.mxu0 0.0
    %2134 = vmatprep.subr.mxu0 0.0
    %2135 = vmatpush2.msra.mxu0 0.0
    %2136 = vmatprep.subr.mxu0 0.0
    %2137 = vmatpush2.msra.mxu0 0.0
    %2138 = vmatprep.subr.mxu0 0.0
    %2139 = vmatpush2.msra.mxu0 0.0
    %2140 = vmatprep.subr.mxu0 0.0
    %2141 = vmatpush2.msra.mxu0 0.0
    %2142 = vmatprep.subr.mxu0 0.0
    %2143 = vmatpush2.msra.mxu0 0.0
    %2144 = vmatprep.subr.mxu0 0.0
    %2145 = vmatpush2.msra.mxu0 0.0
    %2146 = vmatprep.subr.mxu0 0.0
    %2147 = vmatpush2.msra.mxu0 0.0
    %2148 = vmatprep.subr.mxu0 0.0
    %2149 = vmatpush2.msra.mxu0 0.0
    %2150 = vmatprep.subr.mxu0 0.0
    %2151 = vmatpush2.msra.mxu0 0.0
    %2152 = vmatprep.subr.mxu0 0.0
    %2153 = vmatpush2.msra.mxu0 0.0
    %2154 = vmatprep.subr.mxu0 0.0
    %2155 = vmatpush2.msra.mxu0 0.0
    %2156 = vmatprep.subr.mxu0 0.0
    %2157 = vmatpush2.msra.mxu0 0.0
    %2158 = vmatprep.subr.mxu0 0.0
    %2159 = vmatpush2.msra.mxu0 0.0
    %2160 = vmatprep.subr.mxu0 0.0
    %2161 = vmatpush2.msra.mxu0 0.0
    %2162 = vmatprep.subr.mxu0 0.0
    %2163 = vmatpush2.msra.mxu0 0.0
    %2164 = vmatprep.mubr.f32.mxu0 0.0
    %2165 = vmatmul.mubr.f32.gmra.mxu0 %v2094
    %v2166 = vpop.f32.mrf.mxu0
    %v2167 = vadd.f32 0.0, %v2166
    %v2168 = vpop.f32.mrf.mxu0
    %2169 = vdwg.mxu0
    %v2170 = vld [vmem:[%s11] sm:$0xff]
    %v2171 = vld [vmem:[%s11 + $0x8] sm:$0xff]
    %v2172 = vld [vmem:[%s11 + $0x10] sm:$0xff]
    %v2173 = vld [vmem:[%s11 + $0x18] sm:$0xff]
    %v2174 = vld [vmem:[%s11 + $0x20] sm:$0xff]
    %v2175 = vld [vmem:[%s11 + $0x28] sm:$0xff]
    %v2176 = vld [vmem:[%s11 + $0x30] sm:$0xff]
    %v2177 = vld [vmem:[%s11 + $0x38] sm:$0xff]
    %s2178 = scalar_lea.vmem %s10, 2
    %v2179 = vld [vmem:[%s2178] sm:$0x3]
    %v2181 = vsel %vm2092, %v2179, 0
    %2183 = vmatprep.subr.mxu0 0.0
    %2184 = vmatpush1.msra.mxu0 0.0
    %2185 = vmatprep.subr.mxu0 0.0
    %2186 = vmatpush1.msra.mxu0 0.0
    %2187 = vmatprep.subr.mxu0 0.0
    %2188 = vmatpush1.msra.mxu0 0.0
    %2189 = vmatprep.subr.mxu0 0.0
    %2190 = vmatpush1.msra.mxu0 0.0
    %2191 = vmatprep.subr.mxu0 0.0
    %2192 = vmatpush1.msra.mxu0 0.0
    %2193 = vmatprep.subr.mxu0 0.0
    %2194 = vmatpush1.msra.mxu0 0.0
    %2195 = vmatprep.subr.mxu0 0.0
    %2196 = vmatpush1.msra.mxu0 0.0
    %2197 = vmatprep.subr.mxu0 0.0
    %2198 = vmatpush1.msra.mxu0 0.0
    %2199 = vmatprep.subr.mxu0 0.0
    %2200 = vmatpush1.msra.mxu0 0.0
    %2201 = vmatprep.subr.mxu0 0.0
    %2202 = vmatpush1.msra.mxu0 0.0
    %2203 = vmatprep.subr.mxu0 0.0
    %2204 = vmatpush1.msra.mxu0 0.0
    %2205 = vmatprep.subr.mxu0 0.0
    %2206 = vmatpush1.msra.mxu0 0.0
    %2207 = vmatprep.subr.mxu0 0.0
    %2208 = vmatpush1.msra.mxu0 0.0
    %2209 = vmatprep.subr.mxu0 0.0
    %2210 = vmatpush1.msra.mxu0 0.0
    %2211 = vmatprep.subr.mxu0 0.0
    %2212 = vmatpush1.msra.mxu0 0.0
    %2213 = vmatprep.subr.mxu0 0.0
    %2214 = vmatpush1.msra.mxu0 %v2098
    %2215 = vmatprep.subr.mxu0 0.0
    %2216 = vmatpush2.msra.mxu0 0.0
    %2217 = vmatprep.subr.mxu0 0.0
    %2218 = vmatpush2.msra.mxu0 0.0
    %2219 = vmatprep.subr.mxu0 0.0
    %2220 = vmatpush2.msra.mxu0 0.0
    %2221 = vmatprep.subr.mxu0 0.0
    %2222 = vmatpush2.msra.mxu0 0.0
    %2223 = vmatprep.subr.mxu0 0.0
    %2224 = vmatpush2.msra.mxu0 0.0
    %2225 = vmatprep.subr.mxu0 0.0
    %2226 = vmatpush2.msra.mxu0 0.0
    %2227 = vmatprep.subr.mxu0 0.0
    %2228 = vmatpush2.msra.mxu0 0.0
    %2229 = vmatprep.subr.mxu0 0.0
    %2230 = vmatpush2.msra.mxu0 0.0
    %2231 = vmatprep.subr.mxu0 0.0
    %2232 = vmatpush2.msra.mxu0 0.0
    %2233 = vmatprep.subr.mxu0 0.0
    %2234 = vmatpush2.msra.mxu0 0.0
    %2235 = vmatprep.subr.mxu0 0.0
    %2236 = vmatpush2.msra.mxu0 0.0
    %2237 = vmatprep.subr.mxu0 0.0
    %2238 = vmatpush2.msra.mxu0 0.0
    %2239 = vmatprep.subr.mxu0 0.0
    %2240 = vmatpush2.msra.mxu0 0.0
    %2241 = vmatprep.subr.mxu0 0.0
    %2242 = vmatpush2.msra.mxu0 0.0
    %2243 = vmatprep.subr.mxu0 0.0
    %2244 = vmatpush2.msra.mxu0 0.0
    %2245 = vmatprep.subr.mxu0 0.0
    %2246 = vmatpush2.msra.mxu0 0.0
    %2247 = vmatprep.mubr.f32.mxu0 0.0
    %2248 = vmatmul.mubr.f32.gmra.mxu0 %v2181
    %v2249 = vpop.f32.mrf.mxu0
    %v2250 = vadd.f32 0.0, %v2249
    %v2251 = vpop.f32.mrf.mxu0
    %2252 = vdwg.mxu0
    %s2253 = scalar_lea.vmem %s11, 64
    %v2254 = vld [vmem:[%s2253] sm:$0xff]
    %v2255 = vld [vmem:[%s2253 + $0x8] sm:$0xff]
    %v2256 = vld [vmem:[%s2253 + $0x10] sm:$0xff]
    %v2257 = vld [vmem:[%s2253 + $0x18] sm:$0xff]
    %v2258 = vld [vmem:[%s2253 + $0x20] sm:$0xff]
    %v2259 = vld [vmem:[%s2253 + $0x28] sm:$0xff]
    %v2260 = vld [vmem:[%s2253 + $0x30] sm:$0xff]
    %v2261 = vld [vmem:[%s2253 + $0x38] sm:$0xff]
    %v2263 = vsel %vm281, %v2250, 0
    %2265 = vmatprep.subr.mxu0 0.0
    %2266 = vmatpush1.msra.mxu0 0.0
    %2267 = vmatprep.subr.mxu0 0.0
    %2268 = vmatpush1.msra.mxu0 0.0
    %2269 = vmatprep.subr.mxu0 0.0
    %2270 = vmatpush1.msra.mxu0 0.0
    %2271 = vmatprep.subr.mxu0 0.0
    %2272 = vmatpush1.msra.mxu0 0.0
    %2273 = vmatprep.subr.mxu0 0.0
    %2274 = vmatpush1.msra.mxu0 0.0
    %2275 = vmatprep.subr.mxu0 0.0
    %2276 = vmatpush1.msra.mxu0 0.0
    %2277 = vmatprep.subr.mxu0 0.0
    %2278 = vmatpush1.msra.mxu0 0.0
    %2279 = vmatprep.subr.mxu0 0.0
    %2280 = vmatpush1.msra.mxu0 0.0
    %2281 = vmatprep.subr.mxu0 0.0
    %2282 = vmatpush1.msra.mxu0 %v2261
    %2283 = vmatprep.subr.mxu0 0.0
    %2284 = vmatpush1.msra.mxu0 %v2260
    %2285 = vmatprep.subr.mxu0 0.0
    %2286 = vmatpush1.msra.mxu0 %v2259
    %2287 = vmatprep.subr.mxu0 0.0
    %2288 = vmatpush1.msra.mxu0 %v2258
    %2289 = vmatprep.subr.mxu0 0.0
    %2290 = vmatpush1.msra.mxu0 %v2257
    %2291 = vmatprep.subr.mxu0 0.0
    %2292 = vmatpush1.msra.mxu0 %v2256
    %2293 = vmatprep.subr.mxu0 0.0
    %2294 = vmatpush1.msra.mxu0 %v2255
    %2295 = vmatprep.subr.mxu0 0.0
    %2296 = vmatpush1.msra.mxu0 %v2254
    %2297 = vmatprep.subr.mxu0 0.0
    %2298 = vmatpush2.msra.mxu0 0.0
    %2299 = vmatprep.subr.mxu0 0.0
    %2300 = vmatpush2.msra.mxu0 0.0
    %2301 = vmatprep.subr.mxu0 0.0
    %2302 = vmatpush2.msra.mxu0 0.0
    %2303 = vmatprep.subr.mxu0 0.0
    %2304 = vmatpush2.msra.mxu0 0.0
    %2305 = vmatprep.subr.mxu0 0.0
    %2306 = vmatpush2.msra.mxu0 0.0
    %2307 = vmatprep.subr.mxu0 0.0
    %2308 = vmatpush2.msra.mxu0 0.0
    %2309 = vmatprep.subr.mxu0 0.0
    %2310 = vmatpush2.msra.mxu0 0.0
    %2311 = vmatprep.subr.mxu0 0.0
    %2312 = vmatpush2.msra.mxu0 0.0
    %2313 = vmatprep.subr.mxu0 0.0
    %2314 = vmatpush2.msra.mxu0 0.0
    %2315 = vmatprep.subr.mxu0 0.0
    %2316 = vmatpush2.msra.mxu0 0.0
    %2317 = vmatprep.subr.mxu0 0.0
    %2318 = vmatpush2.msra.mxu0 0.0
    %2319 = vmatprep.subr.mxu0 0.0
    %2320 = vmatpush2.msra.mxu0 0.0
    %2321 = vmatprep.subr.mxu0 0.0
    %2322 = vmatpush2.msra.mxu0 0.0
    %2323 = vmatprep.subr.mxu0 0.0
    %2324 = vmatpush2.msra.mxu0 0.0
    %2325 = vmatprep.subr.mxu0 0.0
    %2326 = vmatpush2.msra.mxu0 0.0
    %2327 = vmatprep.subr.mxu0 0.0
    %2328 = vmatpush2.msra.mxu0 0.0
    %2329 = vmatprep.mubr.f32.mxu0 0.0
    %2330 = vmatmul.mubr.f32.gmra.mxu0 %v2263
    %v2331 = vpop.f32.mrf.mxu0
    %v2332 = vadd.f32 0.0, %v2331
    %v2333 = vpop.f32.mrf.mxu0
    %2334 = vdwg.mxu0
    %v2336 = vsel %vm281, %v2167, 0
    %2338 = vmatprep.subr.mxu0 0.0
    %2339 = vmatpush1.msra.mxu0 0.0
    %2340 = vmatprep.subr.mxu0 0.0
    %2341 = vmatpush1.msra.mxu0 0.0
    %2342 = vmatprep.subr.mxu0 0.0
    %2343 = vmatpush1.msra.mxu0 0.0
    %2344 = vmatprep.subr.mxu0 0.0
    %2345 = vmatpush1.msra.mxu0 0.0
    %2346 = vmatprep.subr.mxu0 0.0
    %2347 = vmatpush1.msra.mxu0 0.0
    %2348 = vmatprep.subr.mxu0 0.0
    %2349 = vmatpush1.msra.mxu0 0.0
    %2350 = vmatprep.subr.mxu0 0.0
    %2351 = vmatpush1.msra.mxu0 0.0
    %2352 = vmatprep.subr.mxu0 0.0
    %2353 = vmatpush1.msra.mxu0 0.0
    %2354 = vmatprep.subr.mxu0 0.0
    %2355 = vmatpush1.msra.mxu0 %v2177
    %2356 = vmatprep.subr.mxu0 0.0
    %2357 = vmatpush1.msra.mxu0 %v2176
    %2358 = vmatprep.subr.mxu0 0.0
    %2359 = vmatpush1.msra.mxu0 %v2175
    %2360 = vmatprep.subr.mxu0 0.0
    %2361 = vmatpush1.msra.mxu0 %v2174
    %2362 = vmatprep.subr.mxu0 0.0
    %2363 = vmatpush1.msra.mxu0 %v2173
    %2364 = vmatprep.subr.mxu0 0.0
    %2365 = vmatpush1.msra.mxu0 %v2172
    %2366 = vmatprep.subr.mxu0 0.0
    %2367 = vmatpush1.msra.mxu0 %v2171
    %2368 = vmatprep.subr.mxu0 0.0
    %2369 = vmatpush1.msra.mxu0 %v2170
    %2370 = vmatprep.subr.mxu0 0.0
    %2371 = vmatpush2.msra.mxu0 0.0
    %2372 = vmatprep.subr.mxu0 0.0
    %2373 = vmatpush2.msra.mxu0 0.0
    %2374 = vmatprep.subr.mxu0 0.0
    %2375 = vmatpush2.msra.mxu0 0.0
    %2376 = vmatprep.subr.mxu0 0.0
    %2377 = vmatpush2.msra.mxu0 0.0
    %2378 = vmatprep.subr.mxu0 0.0
    %2379 = vmatpush2.msra.mxu0 0.0
    %2380 = vmatprep.subr.mxu0 0.0
    %2381 = vmatpush2.msra.mxu0 0.0
    %2382 = vmatprep.subr.mxu0 0.0
    %2383 = vmatpush2.msra.mxu0 0.0
    %2384 = vmatprep.subr.mxu0 0.0
    %2385 = vmatpush2.msra.mxu0 0.0
    %2386 = vmatprep.subr.mxu0 0.0
    %2387 = vmatpush2.msra.mxu0 0.0
    %2388 = vmatprep.subr.mxu0 0.0
    %2389 = vmatpush2.msra.mxu0 0.0
    %2390 = vmatprep.subr.mxu0 0.0
    %2391 = vmatpush2.msra.mxu0 0.0
    %2392 = vmatprep.subr.mxu0 0.0
    %2393 = vmatpush2.msra.mxu0 0.0
    %2394 = vmatprep.subr.mxu0 0.0
    %2395 = vmatpush2.msra.mxu0 0.0
    %2396 = vmatprep.subr.mxu0 0.0
    %2397 = vmatpush2.msra.mxu0 0.0
    %2398 = vmatprep.subr.mxu0 0.0
    %2399 = vmatpush2.msra.mxu0 0.0
    %2400 = vmatprep.subr.mxu0 0.0
    %2401 = vmatpush2.msra.mxu0 0.0
    %2402 = vmatprep.mubr.f32.mxu0 0.0
    %2403 = vmatmul.mubr.f32.gmra.mxu0 %v2336
    %v2404 = vpop.f32.mrf.mxu0
    %v2405 = vadd.f32 %v2332, %v2404
    %v2406 = vpop.f32.mrf.mxu0
    %2407 = vdwg.mxu0
    %v2408 = vld [vmem:[%s12] sm:$0x1]
    %v2410 = vlaneseq
    %v2411 = vshrl.u32 %v2410, 7
    %v2412 = vsub.s32 0, %v2411
    %v2413 = vrot.slane %v2408, %v2412
    %v2415 = vadd.f32 %v2405, %v2413
    %vm2416 = vcmp.ge.f32.partialorder %v2415, 0.0
    %v2417 = vmul.f32 %v2415, 0.2
    %v2418 = vsel %vm2416, %v2415, %v2417
    %v2419 = vld [vmem:[%s13] sm:$0xff]
    %v2420 = vld [vmem:[%s13 + $0x8] sm:$0xff]
    %v2421 = vld [vmem:[%s13 + $0x10] sm:$0xff]
    %v2422 = vld [vmem:[%s13 + $0x18] sm:$0xff]
    %v2423 = vld [vmem:[%s14] sm:$0x1]
    %v2425 = vlaneseq
    %v2426 = vshrl.u32 %v2425, 7
    %v2427 = vsub.s32 0, %v2426
    %v2428 = vrot.slane %v2423, %v2427
    %v2431 = vsel %vm98, %v2418, 0
    %2433 = vmatprep.subr.mxu0 0.0
    %2434 = vmatpush1.msra.mxu0 0.0
    %2435 = vmatprep.subr.mxu0 0.0
    %2436 = vmatpush1.msra.mxu0 0.0
    %2437 = vmatprep.subr.mxu0 0.0
    %2438 = vmatpush1.msra.mxu0 0.0
    %2439 = vmatprep.subr.mxu0 0.0
    %2440 = vmatpush1.msra.mxu0 0.0
    %2441 = vmatprep.subr.mxu0 0.0
    %2442 = vmatpush1.msra.mxu0 0.0
    %2443 = vmatprep.subr.mxu0 0.0
    %2444 = vmatpush1.msra.mxu0 0.0
    %2445 = vmatprep.subr.mxu0 0.0
    %2446 = vmatpush1.msra.mxu0 0.0
    %2447 = vmatprep.subr.mxu0 0.0
    %2448 = vmatpush1.msra.mxu0 0.0
    %2449 = vmatprep.subr.mxu0 0.0
    %2450 = vmatpush1.msra.mxu0 0.0
    %2451 = vmatprep.subr.mxu0 0.0
    %2452 = vmatpush1.msra.mxu0 0.0
    %2453 = vmatprep.subr.mxu0 0.0
    %2454 = vmatpush1.msra.mxu0 0.0
    %2455 = vmatprep.subr.mxu0 0.0
    %2456 = vmatpush1.msra.mxu0 0.0
    %2457 = vmatprep.subr.mxu0 0.0
    %2458 = vmatpush1.msra.mxu0 %v2422
    %2459 = vmatprep.subr.mxu0 0.0
    %2460 = vmatpush1.msra.mxu0 %v2421
    %2461 = vmatprep.subr.mxu0 0.0
    %2462 = vmatpush1.msra.mxu0 %v2420
    %2463 = vmatprep.subr.mxu0 0.0
    %2464 = vmatpush1.msra.mxu0 %v2419
    %2465 = vmatprep.subr.mxu0 0.0
    %2466 = vmatpush2.msra.mxu0 0.0
    %2467 = vmatprep.subr.mxu0 0.0
    %2468 = vmatpush2.msra.mxu0 0.0
    %2469 = vmatprep.subr.mxu0 0.0
    %2470 = vmatpush2.msra.mxu0 0.0
    %2471 = vmatprep.subr.mxu0 0.0
    %2472 = vmatpush2.msra.mxu0 0.0
    %2473 = vmatprep.subr.mxu0 0.0
    %2474 = vmatpush2.msra.mxu0 0.0
    %2475 = vmatprep.subr.mxu0 0.0
    %2476 = vmatpush2.msra.mxu0 0.0
    %2477 = vmatprep.subr.mxu0 0.0
    %2478 = vmatpush2.msra.mxu0 0.0
    %2479 = vmatprep.subr.mxu0 0.0
    %2480 = vmatpush2.msra.mxu0 0.0
    %2481 = vmatprep.subr.mxu0 0.0
    %2482 = vmatpush2.msra.mxu0 0.0
    %2483 = vmatprep.subr.mxu0 0.0
    %2484 = vmatpush2.msra.mxu0 0.0
    %2485 = vmatprep.subr.mxu0 0.0
    %2486 = vmatpush2.msra.mxu0 0.0
    %2487 = vmatprep.subr.mxu0 0.0
    %2488 = vmatpush2.msra.mxu0 0.0
    %2489 = vmatprep.subr.mxu0 0.0
    %2490 = vmatpush2.msra.mxu0 0.0
    %2491 = vmatprep.subr.mxu0 0.0
    %2492 = vmatpush2.msra.mxu0 0.0
    %2493 = vmatprep.subr.mxu0 0.0
    %2494 = vmatpush2.msra.mxu0 0.0
    %2495 = vmatprep.subr.mxu0 0.0
    %2496 = vmatpush2.msra.mxu0 0.0
    %2497 = vmatprep.mubr.f32.mxu0 0.0
    %2498 = vmatmul.mubr.f32.gmra.mxu0 %v2431
    %v2499 = vpop.f32.mrf.mxu0
    %v2500 = vadd.f32 %v2428, %v2499
    %v2501 = vpop.f32.mrf.mxu0
    %2502 = vdwg.mxu0
    %vm2503 = vcmask 123904
    %2504 = vst.msk [vmem:[#allocation8] sm:$0x3] %vm2503, %v2500
    // Predicated region
    $region74: #{net1_forward.1} parent=1 // pred_check
      _
    $region75: #{net1_forward.1} parent=1 // pred_check_branch
      %2506 = sbr.rel (0) target = $region77
    $region76: #{net1_forward.1} parent=1 // pred_region
      %s2508 = ssub.s32 32, 32
      %2509 = vsyncadd [#allocation4], %s2508
      %s2511 = sshll.u32 [#allocation8], 4
      %s2512 = int_to_ptr.vmem [resolvable:$true] %s2511
      %2514 = dma.vmem_to_hbm [thread:$0]  %s2512, 32, %s15, [#allocation4]
    $region77: #{net1_forward.1} parent=1 // pred_fallthru
      _
    // Predicated region
    $region78: #{net1_forward.1} parent=1 // pred_check
      _
    $region79: #{net1_forward.1} parent=1 // pred_check_branch
      %2516 = sbr.rel (0) target = $region81
    $region80: #{net1_forward.1} parent=1 // pred_region
      %2517 = dma.done [#allocation4], 32
    $region81: #{net1_forward.1} parent=1 // pred_fallthru
      _
    %2518 = vsyncpa [#allocation3], 1
    %2519 = vsyncpa [#allocation6], 1
    %2520 = vsyncpa [#allocation4], 1

</llo_original>
